<compile_context>
chip_gen: v5e
topology: v5e:2x2
jax: 0.10.0
libtpu: 0.0.40
codegen_flags: <defaults>
</compile_context>

<pallas_src>
import functools

import jax
import jax.numpy as jnp
from jax import lax
from jax.experimental import pallas as pl
from jax.experimental.pallas import tpu as pltpu


# ----------------------------------------------------------------------------
# Weight "lowering" helpers (pure JAX, run once per forward; in a real model
# these would be precomputed at load time).
# ----------------------------------------------------------------------------
def _conv1_bands(w1, W):
    """9x9, Cin=1 conv -> per-row band matrices (KH, W, W*Cout).

    out1[h, w*Cout+co] = sum_kh  x_vpad[h+kh, :] @ band[kh]
    where band[kh, j, w*Cout+co] = w1[kh, j-w+P, 0, co] (0 outside the band).
    """
    KH, KW, _, Cout = w1.shape
    p = KW // 2
    j = jnp.arange(W)[:, None]                 # input column
    w = jnp.arange(W)[None, :]                 # output column
    d = j - w + p                              # kernel kw index
    mask = (d >= 0) & (d < KW)
    dc = jnp.clip(d, 0, KW - 1)
    wk = w1[:, :, 0, :]                                            # (KH, KW, Cout)
    band = jnp.where(mask[None, :, :, None], wk[:, dc, :], 0.0)    # (KH, W, W, Cout)
    return band.reshape(KH, W, W * Cout)


def _conv2_blockdiag(w2, W):
    """1x1 conv -> block-diagonal matrix (W*Cin, W*Cout) acting on (H, W*Cin)."""
    Cin, Cout = w2.shape[2], w2.shape[3]
    eye = jnp.eye(W, dtype=w2.dtype)
    bd = eye[:, None, :, None] * w2[0, 0][None, :, None, :]        # (W, Cin, W, Cout)
    return bd.reshape(W * Cin, W * Cout)


def _conv3_band(w3, W):
    """5x5, Cout=1 conv -> single im2col weight matrix (KH*W*Cin, W)."""
    KH, KW, Cin, _ = w3.shape
    p = KW // 2
    jp = jnp.arange(W)[:, None]                # input column
    w = jnp.arange(W)[None, :]                 # output column
    d = jp - w + p
    mask = (d >= 0) & (d < KW)
    dc = jnp.clip(d, 0, KW - 1)
    wk = w3[:, :, :, 0]                                            # (KH, KW, Cin)
    band = jnp.where(mask[None, :, :, None], wk[:, dc, :], 0.0)    # (KH, W, W, Cin) [kh, jp, w, c]
    band = band.transpose(0, 1, 3, 2)                              # [kh, jp, c, w]
    return band.reshape(KH * W * Cin, W)                           # row = kh*W*Cin + jp*Cin + c


# ----------------------------------------------------------------------------
# Fused kernel: one image per grid step, all three layers in VMEM/vregs.
# ----------------------------------------------------------------------------
def _srcnn_fused_kernel(x_ref, w1_ref, b1_ref, w2_ref, b2_ref, w3_ref, b3_ref,
                        o_ref, *, H, KH1, KH3):
    x = x_ref[0]                                       # (H, W) f32
    W = x.shape[1]

    # ---- conv1: 9x9, 1 -> 32 (banded MXU matmuls, N = W*32 = 512 lane-dense)
    pad1 = jnp.zeros((KH1 // 2, W), jnp.float32)
    xv = jnp.concatenate([pad1, x, pad1], axis=0)      # (H + KH1 - 1, W), in-kernel 'same' pad
    acc1 = jnp.dot(xv[0:H, :], w1_ref[0], preferred_element_type=jnp.float32)
    for kh in range(1, KH1):
        acc1 = acc1 + jnp.dot(xv[kh:kh + H, :], w1_ref[kh],
                              preferred_element_type=jnp.float32)
    act1 = jnp.maximum(acc1 + b1_ref[...], 0.0)        # (H, W*32)

    # ---- conv2: 1x1, 32 -> 16 (block-diagonal matmul, K = 512) --------------
    act2 = jnp.maximum(
        jnp.dot(act1, w2_ref[...], preferred_element_type=jnp.float32)
        + b2_ref[...], 0.0)                            # (H, W*16)

    # ---- conv3: 5x5, 16 -> 1 (taps concatenated along K -> one K=1280 matmul)
    pad3 = jnp.zeros((KH3 // 2, act2.shape[1]), jnp.float32)
    a2v = jnp.concatenate([pad3, act2, pad3], axis=0)                # (H + KH3 - 1, W*16)
    lhs3 = jnp.concatenate([a2v[kh:kh + H, :] for kh in range(KH3)],
                           axis=1)                                   # (H, KH3*W*16) = (16, 1280)
    out = jnp.maximum(
        jnp.dot(lhs3, w3_ref[...], preferred_element_type=jnp.float32)
        + b3_ref[...], 0.0)                            # (H, W)

    o_ref[0] = out.astype(o_ref.dtype)


@jax.jit
def super_resolution_forward(x_nchw, params):
    """Matches SuperResolution.forward: relu(conv3(relu(conv2(relu(conv1(x))))))."""
    (w1, b1), (w2, b2), (w3, b3) = params["conv1"], params["conv2"], params["conv3"]
    N, C, H, W = x_nchw.shape
    assert C == 1
    x = x_nchw.reshape(N, H, W).astype(jnp.float32)

    KH1, C1 = w1.shape[0], w1.shape[3]
    KH3, C2 = w3.shape[0], w2.shape[3]

    # Lowered weight matrices (~880 KB total, fetched into VMEM once).
    w1m = _conv1_bands(w1, W)                   # (9, 16, 512)
    w2m = _conv2_blockdiag(w2, W)               # (512, 256)
    w3m = _conv3_band(w3, W)                    # (1280, 16)
    b1r = jnp.tile(b1, W).reshape(1, W * C1)    # (1, 512)
    b2r = jnp.tile(b2, W).reshape(1, W * C2)    # (1, 256)
    b3r = b3.reshape(1, 1)

    kernel = functools.partial(_srcnn_fused_kernel, H=H, KH1=KH1, KH3=KH3)
    out = pl.pallas_call(
        kernel,
        out_shape=jax.ShapeDtypeStruct((N, H, W), jnp.float32),
        grid=(N,),
        in_specs=[
            pl.BlockSpec((1, H, W), lambda n: (n, 0, 0)),
            pl.BlockSpec(w1m.shape, lambda n: (0, 0, 0)),
            pl.BlockSpec(b1r.shape, lambda n: (0, 0)),
            pl.BlockSpec(w2m.shape, lambda n: (0, 0)),
            pl.BlockSpec(b2r.shape, lambda n: (0, 0)),
            pl.BlockSpec(w3m.shape, lambda n: (0, 0)),
            pl.BlockSpec(b3r.shape, lambda n: (0, 0)),
        ],
        out_specs=pl.BlockSpec((1, H, W), lambda n: (n, 0, 0)),
        compiler_params=pltpu.CompilerParams(
            dimension_semantics=("parallel",)),   # one image per TC on v7x
    )(x, w1m, b1r, w2m, b2r, w3m, b3r)

    return out.reshape(N, 1, H, W)                # NCHW, metadata-only reshape


# ----------------------------------------------------------------------------
# Parameter init (PyTorch-default-like) and pure-JAX reference for self-check.
# ----------------------------------------------------------------------------
def init_params(key):
    def make(key, kh, kw, cin, cout):
        kw_, kb_ = jax.random.split(key)
        bound = 1.0 / (cin * kh * kw) ** 0.5
        w = jax.random.uniform(kw_, (kh, kw, cin, cout), jnp.float32, -bound, bound)
        b = jax.random.uniform(kb_, (cout,), jnp.float32, -bound, bound)
        return w, b

    k1, k2, k3 = jax.random.split(key, 3)
    return {
        "conv1": make(k1, 9, 9, 1, 32),
        "conv2": make(k2, 1, 1, 32, 16),
        "conv3": make(k3, 5, 5, 16, 1),
    }


def _reference_forward(x_nchw, params):
    x = jnp.transpose(x_nchw, (0, 2, 3, 1))
    for name in ("conv1", "conv2", "conv3"):
        w, b = params[name]
        y = lax.conv_general_dilated(
            x, w, window_strides=(1, 1), padding="SAME",
            dimension_numbers=("NHWC", "HWIO", "NHWC"),
            precision=lax.Precision.HIGHEST)
        x = jnp.maximum(y + b[None, None, None, :], 0.0)
    return jnp.transpose(x, (0, 3, 1, 2))


if __name__ == "__main__":
    key = jax.random.PRNGKey(0)
    k_params, k_x = jax.random.split(key)

    params = init_params(k_params)
    x = jax.random.normal(k_x, (2, 1, 16, 16), jnp.float32)   # NCHW like PyTorch

    out = jax.block_until_ready(super_resolution_forward(x, params))
    ref = jax.block_until_ready(_reference_forward(x, params))

    assert out.shape == (2, 1, 16, 16)
    assert jnp.allclose(out, ref, atol=2e-4, rtol=2e-4), \
        float(jnp.max(jnp.abs(out - ref)))

    print("KERNEL_OK")
</pallas_src>

<mosaic_0001>
module attributes {stable_mosaic.version = 11 : i64} {
  func.func @_srcnn_fused_kernel(%arg0: i32, %arg1: memref<1x16x16xf32, #tpu.memory_space<vmem>>, %arg2: memref<9x16x512xf32, #tpu.memory_space<vmem>>, %arg3: memref<1x512xf32, #tpu.memory_space<vmem>>, %arg4: memref<512x256xf32, #tpu.memory_space<vmem>>, %arg5: memref<1x256xf32, #tpu.memory_space<vmem>>, %arg6: memref<1280x16xf32, #tpu.memory_space<vmem>>, %arg7: memref<1x1xf32, #tpu.memory_space<vmem>>, %arg8: memref<1x16x16xf32, #tpu.memory_space<vmem>>) attributes {dimension_semantics = [#tpu.dimension_semantics<parallel>], iteration_bounds = array<i64: 2>, scalar_prefetch = 0 : i64, scratch_operands = 0 : i64, tpu.core_type = #tpu.core_type<tc>, window_params = [{transform_indices = @transform_0, window_bounds = array<i64: 1, 16, 16>}, {pipeline_mode = #tpu.pipeline_mode<synchronous>, transform_indices = @transform_1, window_bounds = array<i64: 9, 16, 512>}, {pipeline_mode = #tpu.pipeline_mode<synchronous>, transform_indices = @transform_2, window_bounds = array<i64: 1, 512>}, {pipeline_mode = #tpu.pipeline_mode<synchronous>, transform_indices = @transform_3, window_bounds = array<i64: 512, 256>}, {pipeline_mode = #tpu.pipeline_mode<synchronous>, transform_indices = @transform_4, window_bounds = array<i64: 1, 256>}, {pipeline_mode = #tpu.pipeline_mode<synchronous>, transform_indices = @transform_5, window_bounds = array<i64: 1280, 16>}, {pipeline_mode = #tpu.pipeline_mode<synchronous>, transform_indices = @transform_6, window_bounds = array<i64: 1, 1>}, {transform_indices = @transform_7, window_bounds = array<i64: 1, 16, 16>}]} {
    %c0 = arith.constant 0 : index
    %c0_0 = arith.constant 0 : index
    %c0_1 = arith.constant 0 : index
    %0 = vector.load %arg1[%c0, %c0_0, %c0_1] : memref<1x16x16xf32, #tpu.memory_space<vmem>>, vector<1x16x16xf32>
    %1 = vector.shape_cast %0 : vector<1x16x16xf32> to vector<16x16xf32>
    %cst = arith.constant 0.000000e+00 : f32
    %2 = vector.broadcast %cst : f32 to vector<4x16xf32>
    %3 = tpu.concatenate %2, %1, %2 in 0 : vector<4x16xf32>, vector<16x16xf32>, vector<4x16xf32> -> vector<24x16xf32>
    %4 = vector.extract_strided_slice %3 {offsets = [0, 0], sizes = [16, 16], strides = [1, 1]} : vector<24x16xf32> to vector<16x16xf32>
    %c0_2 = arith.constant 0 : index
    %c0_3 = arith.constant 0 : index
    %c0_4 = arith.constant 0 : index
    %5 = vector.load %arg2[%c0_2, %c0_3, %c0_4] : memref<9x16x512xf32, #tpu.memory_space<vmem>>, vector<1x16x512xf32>
    %6 = vector.shape_cast %5 : vector<1x16x512xf32> to vector<16x512xf32>
    %cst_5 = arith.constant dense<0.000000e+00> : vector<16x512xf32>
    %7 = tpu.matmul %4, %6, %cst_5 {dimension_numbers = #tpu.dot_dimension_numbers<[1], [0], [0], [1], [0, 0, 1, 1], [], []>} : vector<16x16xf32>, vector<16x512xf32>, vector<16x512xf32> -> vector<16x512xf32>
    %8 = vector.extract_strided_slice %3 {offsets = [1, 0], sizes = [16, 16], strides = [1, 1]} : vector<24x16xf32> to vector<16x16xf32>
    %c1 = arith.constant 1 : index
    %c0_6 = arith.constant 0 : index
    %c0_7 = arith.constant 0 : index
    %9 = vector.load %arg2[%c1, %c0_6, %c0_7] : memref<9x16x512xf32, #tpu.memory_space<vmem>>, vector<1x16x512xf32>
    %10 = vector.shape_cast %9 : vector<1x16x512xf32> to vector<16x512xf32>
    %cst_8 = arith.constant dense<0.000000e+00> : vector<16x512xf32>
    %11 = tpu.matmul %8, %10, %cst_8 {dimension_numbers = #tpu.dot_dimension_numbers<[1], [0], [0], [1], [0, 0, 1, 1], [], []>} : vector<16x16xf32>, vector<16x512xf32>, vector<16x512xf32> -> vector<16x512xf32>
    %12 = arith.addf %7, %11 : vector<16x512xf32>
    %13 = vector.extract_strided_slice %3 {offsets = [2, 0], sizes = [16, 16], strides = [1, 1]} : vector<24x16xf32> to vector<16x16xf32>
    %c2 = arith.constant 2 : index
    %c0_9 = arith.constant 0 : index
    %c0_10 = arith.constant 0 : index
    %14 = vector.load %arg2[%c2, %c0_9, %c0_10] : memref<9x16x512xf32, #tpu.memory_space<vmem>>, vector<1x16x512xf32>
    %15 = vector.shape_cast %14 : vector<1x16x512xf32> to vector<16x512xf32>
    %cst_11 = arith.constant dense<0.000000e+00> : vector<16x512xf32>
    %16 = tpu.matmul %13, %15, %cst_11 {dimension_numbers = #tpu.dot_dimension_numbers<[1], [0], [0], [1], [0, 0, 1, 1], [], []>} : vector<16x16xf32>, vector<16x512xf32>, vector<16x512xf32> -> vector<16x512xf32>
    %17 = arith.addf %12, %16 : vector<16x512xf32>
    %18 = vector.extract_strided_slice %3 {offsets = [3, 0], sizes = [16, 16], strides = [1, 1]} : vector<24x16xf32> to vector<16x16xf32>
    %c3 = arith.constant 3 : index
    %c0_12 = arith.constant 0 : index
    %c0_13 = arith.constant 0 : index
    %19 = vector.load %arg2[%c3, %c0_12, %c0_13] : memref<9x16x512xf32, #tpu.memory_space<vmem>>, vector<1x16x512xf32>
    %20 = vector.shape_cast %19 : vector<1x16x512xf32> to vector<16x512xf32>
    %cst_14 = arith.constant dense<0.000000e+00> : vector<16x512xf32>
    %21 = tpu.matmul %18, %20, %cst_14 {dimension_numbers = #tpu.dot_dimension_numbers<[1], [0], [0], [1], [0, 0, 1, 1], [], []>} : vector<16x16xf32>, vector<16x512xf32>, vector<16x512xf32> -> vector<16x512xf32>
    %22 = arith.addf %17, %21 : vector<16x512xf32>
    %23 = vector.extract_strided_slice %3 {offsets = [4, 0], sizes = [16, 16], strides = [1, 1]} : vector<24x16xf32> to vector<16x16xf32>
    %c4 = arith.constant 4 : index
    %c0_15 = arith.constant 0 : index
    %c0_16 = arith.constant 0 : index
    %24 = vector.load %arg2[%c4, %c0_15, %c0_16] : memref<9x16x512xf32, #tpu.memory_space<vmem>>, vector<1x16x512xf32>
    %25 = vector.shape_cast %24 : vector<1x16x512xf32> to vector<16x512xf32>
    %cst_17 = arith.constant dense<0.000000e+00> : vector<16x512xf32>
    %26 = tpu.matmul %23, %25, %cst_17 {dimension_numbers = #tpu.dot_dimension_numbers<[1], [0], [0], [1], [0, 0, 1, 1], [], []>} : vector<16x16xf32>, vector<16x512xf32>, vector<16x512xf32> -> vector<16x512xf32>
    %27 = arith.addf %22, %26 : vector<16x512xf32>
    %28 = vector.extract_strided_slice %3 {offsets = [5, 0], sizes = [16, 16], strides = [1, 1]} : vector<24x16xf32> to vector<16x16xf32>
    %c5 = arith.constant 5 : index
    %c0_18 = arith.constant 0 : index
    %c0_19 = arith.constant 0 : index
    %29 = vector.load %arg2[%c5, %c0_18, %c0_19] : memref<9x16x512xf32, #tpu.memory_space<vmem>>, vector<1x16x512xf32>
    %30 = vector.shape_cast %29 : vector<1x16x512xf32> to vector<16x512xf32>
    %cst_20 = arith.constant dense<0.000000e+00> : vector<16x512xf32>
    %31 = tpu.matmul %28, %30, %cst_20 {dimension_numbers = #tpu.dot_dimension_numbers<[1], [0], [0], [1], [0, 0, 1, 1], [], []>} : vector<16x16xf32>, vector<16x512xf32>, vector<16x512xf32> -> vector<16x512xf32>
    %32 = arith.addf %27, %31 : vector<16x512xf32>
    %33 = vector.extract_strided_slice %3 {offsets = [6, 0], sizes = [16, 16], strides = [1, 1]} : vector<24x16xf32> to vector<16x16xf32>
    %c6 = arith.constant 6 : index
    %c0_21 = arith.constant 0 : index
    %c0_22 = arith.constant 0 : index
    %34 = vector.load %arg2[%c6, %c0_21, %c0_22] : memref<9x16x512xf32, #tpu.memory_space<vmem>>, vector<1x16x512xf32>
    %35 = vector.shape_cast %34 : vector<1x16x512xf32> to vector<16x512xf32>
    %cst_23 = arith.constant dense<0.000000e+00> : vector<16x512xf32>
    %36 = tpu.matmul %33, %35, %cst_23 {dimension_numbers = #tpu.dot_dimension_numbers<[1], [0], [0], [1], [0, 0, 1, 1], [], []>} : vector<16x16xf32>, vector<16x512xf32>, vector<16x512xf32> -> vector<16x512xf32>
    %37 = arith.addf %32, %36 : vector<16x512xf32>
    %38 = vector.extract_strided_slice %3 {offsets = [7, 0], sizes = [16, 16], strides = [1, 1]} : vector<24x16xf32> to vector<16x16xf32>
    %c7 = arith.constant 7 : index
    %c0_24 = arith.constant 0 : index
    %c0_25 = arith.constant 0 : index
    %39 = vector.load %arg2[%c7, %c0_24, %c0_25] : memref<9x16x512xf32, #tpu.memory_space<vmem>>, vector<1x16x512xf32>
    %40 = vector.shape_cast %39 : vector<1x16x512xf32> to vector<16x512xf32>
    %cst_26 = arith.constant dense<0.000000e+00> : vector<16x512xf32>
    %41 = tpu.matmul %38, %40, %cst_26 {dimension_numbers = #tpu.dot_dimension_numbers<[1], [0], [0], [1], [0, 0, 1, 1], [], []>} : vector<16x16xf32>, vector<16x512xf32>, vector<16x512xf32> -> vector<16x512xf32>
    %42 = arith.addf %37, %41 : vector<16x512xf32>
    %43 = vector.extract_strided_slice %3 {offsets = [8, 0], sizes = [16, 16], strides = [1, 1]} : vector<24x16xf32> to vector<16x16xf32>
    %c8 = arith.constant 8 : index
    %c0_27 = arith.constant 0 : index
    %c0_28 = arith.constant 0 : index
    %44 = vector.load %arg2[%c8, %c0_27, %c0_28] : memref<9x16x512xf32, #tpu.memory_space<vmem>>, vector<1x16x512xf32>
    %45 = vector.shape_cast %44 : vector<1x16x512xf32> to vector<16x512xf32>
    %cst_29 = arith.constant dense<0.000000e+00> : vector<16x512xf32>
    %46 = tpu.matmul %43, %45, %cst_29 {dimension_numbers = #tpu.dot_dimension_numbers<[1], [0], [0], [1], [0, 0, 1, 1], [], []>} : vector<16x16xf32>, vector<16x512xf32>, vector<16x512xf32> -> vector<16x512xf32>
    %47 = arith.addf %42, %46 : vector<16x512xf32>
    %c0_30 = arith.constant 0 : index
    %c0_31 = arith.constant 0 : index
    %48 = vector.load %arg3[%c0_30, %c0_31] : memref<1x512xf32, #tpu.memory_space<vmem>>, vector<1x512xf32>
    %49 = vector.broadcast %48 : vector<1x512xf32> to vector<16x512xf32>
    %50 = arith.addf %47, %49 : vector<16x512xf32>
    %cst_32 = arith.constant 0.000000e+00 : f32
    %51 = vector.broadcast %cst_32 : f32 to vector<16x512xf32>
    %52 = arith.maximumf %50, %51 : vector<16x512xf32>
    %c0_33 = arith.constant 0 : index
    %c0_34 = arith.constant 0 : index
    %53 = vector.load %arg4[%c0_33, %c0_34] : memref<512x256xf32, #tpu.memory_space<vmem>>, vector<512x256xf32>
    %cst_35 = arith.constant dense<0.000000e+00> : vector<16x256xf32>
    %54 = tpu.matmul %52, %53, %cst_35 {dimension_numbers = #tpu.dot_dimension_numbers<[1], [0], [0], [1], [0, 0, 1, 1], [], []>} : vector<16x512xf32>, vector<512x256xf32>, vector<16x256xf32> -> vector<16x256xf32>
    %c0_36 = arith.constant 0 : index
    %c0_37 = arith.constant 0 : index
    %55 = vector.load %arg5[%c0_36, %c0_37] : memref<1x256xf32, #tpu.memory_space<vmem>>, vector<1x256xf32>
    %56 = vector.broadcast %55 : vector<1x256xf32> to vector<16x256xf32>
    %57 = arith.addf %54, %56 : vector<16x256xf32>
    %cst_38 = arith.constant 0.000000e+00 : f32
    %58 = vector.broadcast %cst_38 : f32 to vector<16x256xf32>
    %59 = arith.maximumf %57, %58 : vector<16x256xf32>
    %cst_39 = arith.constant 0.000000e+00 : f32
    %60 = vector.broadcast %cst_39 : f32 to vector<2x256xf32>
    %61 = tpu.concatenate %60, %59, %60 in 0 : vector<2x256xf32>, vector<16x256xf32>, vector<2x256xf32> -> vector<20x256xf32>
    %62 = vector.extract_strided_slice %61 {offsets = [0, 0], sizes = [16, 256], strides = [1, 1]} : vector<20x256xf32> to vector<16x256xf32>
    %63 = vector.extract_strided_slice %61 {offsets = [1, 0], sizes = [16, 256], strides = [1, 1]} : vector<20x256xf32> to vector<16x256xf32>
    %64 = vector.extract_strided_slice %61 {offsets = [2, 0], sizes = [16, 256], strides = [1, 1]} : vector<20x256xf32> to vector<16x256xf32>
    %65 = vector.extract_strided_slice %61 {offsets = [3, 0], sizes = [16, 256], strides = [1, 1]} : vector<20x256xf32> to vector<16x256xf32>
    %66 = vector.extract_strided_slice %61 {offsets = [4, 0], sizes = [16, 256], strides = [1, 1]} : vector<20x256xf32> to vector<16x256xf32>
    %67 = tpu.concatenate %62, %63, %64, %65, %66 in 1 : vector<16x256xf32>, vector<16x256xf32>, vector<16x256xf32>, vector<16x256xf32>, vector<16x256xf32> -> vector<16x1280xf32>
    %c0_40 = arith.constant 0 : index
    %c0_41 = arith.constant 0 : index
    %68 = vector.load %arg6[%c0_40, %c0_41] : memref<1280x16xf32, #tpu.memory_space<vmem>>, vector<1280x16xf32>
    %cst_42 = arith.constant dense<0.000000e+00> : vector<16x16xf32>
    %69 = tpu.matmul %67, %68, %cst_42 {dimension_numbers = #tpu.dot_dimension_numbers<[1], [0], [0], [1], [0, 0, 1, 1], [], []>} : vector<16x1280xf32>, vector<1280x16xf32>, vector<16x16xf32> -> vector<16x16xf32>
    %c0_43 = arith.constant 0 : index
    %c0_44 = arith.constant 0 : index
    %70 = vector.load %arg7[%c0_43, %c0_44] : memref<1x1xf32, #tpu.memory_space<vmem>>, vector<1x1xf32>
    %71 = vector.broadcast %70 : vector<1x1xf32> to vector<16x16xf32>
    %72 = arith.addf %69, %71 : vector<16x16xf32>
    %cst_45 = arith.constant 0.000000e+00 : f32
    %73 = vector.broadcast %cst_45 : f32 to vector<16x16xf32>
    %74 = arith.maximumf %72, %73 : vector<16x16xf32>
    %c0_46 = arith.constant 0 : index
    %c0_47 = arith.constant 0 : index
    %c0_48 = arith.constant 0 : index
    %75 = vector.load %arg8[%c0_46, %c0_47, %c0_48] : memref<1x16x16xf32, #tpu.memory_space<vmem>>, vector<1x16x16xf32>
    %76 = vector.shape_cast %75 : vector<1x16x16xf32> to vector<16x16xf32>
    %77 = vector.shape_cast %74 : vector<16x16xf32> to vector<1x16x16xf32>
    tpu.vector_store %arg8[%c0_46, %c0_47, %c0_48], %77 {strides = array<i32>} : memref<1x16x16xf32, #tpu.memory_space<vmem>>, vector<1x16x16xf32>,
    return
  }
  func.func @transform_0(%arg0: i32) -> (i32, i32, i32) {
    %c0_i32 = arith.constant 0 : i32
    %c0_i32_0 = arith.constant 0 : i32
    %c0_i32_1 = arith.constant 0 : i32
    return %arg0, %c0_i32, %c0_i32_0 : i32, i32, i32
  }
  func.func @transform_1(%arg0: i32) -> (i32, i32, i32) {
    %c0_i32 = arith.constant 0 : i32
    %c0_i32_0 = arith.constant 0 : i32
    %c0_i32_1 = arith.constant 0 : i32
    %c0_i32_2 = arith.constant 0 : i32
    return %c0_i32, %c0_i32_0, %c0_i32_1 : i32, i32, i32
  }
  func.func @transform_2(%arg0: i32) -> (i32, i32) {
    %c0_i32 = arith.constant 0 : i32
    %c0_i32_0 = arith.constant 0 : i32
    %c0_i32_1 = arith.constant 0 : i32
    return %c0_i32, %c0_i32_0 : i32, i32
  }
  func.func @transform_3(%arg0: i32) -> (i32, i32) {
    %c0_i32 = arith.constant 0 : i32
    %c0_i32_0 = arith.constant 0 : i32
    %c0_i32_1 = arith.constant 0 : i32
    return %c0_i32, %c0_i32_0 : i32, i32
  }
  func.func @transform_4(%arg0: i32) -> (i32, i32) {
    %c0_i32 = arith.constant 0 : i32
    %c0_i32_0 = arith.constant 0 : i32
    %c0_i32_1 = arith.constant 0 : i32
    return %c0_i32, %c0_i32_0 : i32, i32
  }
  func.func @transform_5(%arg0: i32) -> (i32, i32) {
    %c0_i32 = arith.constant 0 : i32
    %c0_i32_0 = arith.constant 0 : i32
    %c0_i32_1 = arith.constant 0 : i32
    return %c0_i32, %c0_i32_0 : i32, i32
  }
  func.func @transform_6(%arg0: i32) -> (i32, i32) {
    %c0_i32 = arith.constant 0 : i32
    %c0_i32_0 = arith.constant 0 : i32
    %c0_i32_1 = arith.constant 0 : i32
    return %c0_i32, %c0_i32_0 : i32, i32
  }
  func.func @transform_7(%arg0: i32) -> (i32, i32, i32) {
    %c0_i32 = arith.constant 0 : i32
    %c0_i32_0 = arith.constant 0 : i32
    %c0_i32_1 = arith.constant 0 : i32
    return %arg0, %c0_i32, %c0_i32_0 : i32, i32, i32
  }
}

</mosaic_0001>

<llo_original>
// kernel: tile.13
$region0: #{tile.13}
  #allocation0 [shape = 's32[1]{0}', space=sflag, size = 0x4, scoped, tag = 'scoped memory for tile.13']
  %s0 = inlined_call_operand.vmem [shape: f32[32], index: 0, kind: input, shape index: {}]
  %s1 = inlined_call_operand.vmem [shape: f32[16,32], index: 1, kind: output, shape index: {}]
  // Predicated region
  $region2: #{tile.13} parent=0 // pred_check
    _
  $region3: #{tile.13} parent=0 // pred_check_branch
    %3 = sbr.rel (0) target = $region5
  $region4: #{tile.13} parent=0 // pred_region
    _
  $region5: #{tile.13} parent=0 // pred_fallthru
    _
  %v4 = vld [vmem:[%s0] ss:$0 sm:$0xff]
  %5 = vst [vmem:[%s1] sm:$0xff] %v4
  %s6 = scalar_lea.vmem %s1, 8
  %7 = vst [vmem:[%s6] sm:$0xff] %v4

// kernel: tile.14
$region0: #{tile.14}
  %s0 = inlined_call_operand.vmem [shape: f32[16,32], index: 0, kind: input, shape index: {}]
  %s1 = inlined_call_operand.vmem [shape: f32[1,512], index: 1, kind: output, shape index: {}]
  $region1: #{tile.14} parent=0
    #allocation0 [shape = 'u8[16384]{0}', space=vmem, size = 0x4000, scoped, tag = 'scoped mem for output reshape']
    %v2 = vld [vmem:[%s0] ss:$4 sm:$0xf]
    %vm3 = vcmask 261120
    %4 = vst.msk [vmem:[#allocation0] ss:$8 sm:$0xf] %vm3, %v2
    %s5 = scalar_lea.vmem %s0, 3
    %v6 = vld [vmem:[%s5] ss:$4 sm:$0xf]
    %7 = vrot.lane.b32.xlu0 %v6, 96
    %v8 = vpop.permute.xlu0 %7
    %vm9 = vcmask 1048320
    %10 = vst.msk [vmem:[#allocation0] ss:$8 sm:$0xf] %vm9, %v8
    %s11 = scalar_lea.vmem %s0, 2
    %v12 = vld [vmem:[%s11] ss:$4 sm:$0xf]
    %13 = vrot.lane.b32.xlu0 %v12, 64
    %v14 = vpop.permute.xlu0 %13
    %vm15 = vcmask 785920
    %16 = vst.msk [vmem:[#allocation0] ss:$8 sm:$0xf] %vm15, %v14
    %s17 = scalar_lea.vmem %s0, 1
    %v18 = vld [vmem:[%s17] ss:$4 sm:$0xf]
    %19 = vrot.lane.b32.xlu0 %v18, 32
    %v20 = vpop.permute.xlu0 %19
    %vm21 = vcmask 523520
    %22 = vst.msk [vmem:[#allocation0] ss:$8 sm:$0xf] %vm21, %v20
    %s24 = ssub.s32 2, 1
    %v25 = vld [vmem:[#allocation0] sm:%s24]
    %s27 = ssub.s32 2, 1
    %28 = vst [vmem:[%s1] sm:%s27] %v25
    %s29 = scalar_lea.vmem [#allocation0], 8
    %v30 = vld [vmem:[%s29] sm:%s24]
    %s32 = ssub.s32 2, 1
    %s33 = scalar_lea.vmem %s1, 1
    %34 = vst [vmem:[%s33] sm:%s32] %v30
    %s35 = scalar_lea.vmem [#allocation0], 16
    %v36 = vld [vmem:[%s35] sm:%s24]
    %s38 = ssub.s32 2, 1
    %s39 = scalar_lea.vmem %s1, 2
    %40 = vst [vmem:[%s39] sm:%s38] %v36
    %s41 = scalar_lea.vmem [#allocation0], 24
    %v42 = vld [vmem:[%s41] sm:%s24]
    %s44 = ssub.s32 2, 1
    %s45 = scalar_lea.vmem %s1, 3
    %46 = vst [vmem:[%s45] sm:%s44] %v42

// kernel: tile.18
$region0: #{tile.18}
  #allocation0 [shape = 's32[1]{0}', space=sflag, size = 0x4, scoped, tag = 'scoped memory for tile.18']
  %s0 = inlined_call_operand.vmem [shape: f32[16], index: 0, kind: input, shape index: {}]
  %s1 = inlined_call_operand.vmem [shape: f32[16,16], index: 1, kind: output, shape index: {}]
  // Predicated region
  $region2: #{tile.18} parent=0 // pred_check
    _
  $region3: #{tile.18} parent=0 // pred_check_branch
    %3 = sbr.rel (0) target = $region5
  $region4: #{tile.18} parent=0 // pred_region
    _
  $region5: #{tile.18} parent=0 // pred_fallthru
    _
  %v4 = vld [vmem:[%s0] ss:$0 sm:$0xff]
  %5 = vst [vmem:[%s1] sm:$0xff] %v4
  %s6 = scalar_lea.vmem %s1, 8
  %7 = vst [vmem:[%s6] sm:$0xff] %v4

// kernel: tile.19
$region0: #{tile.19}
  %s0 = inlined_call_operand.vmem [shape: f32[16,16], index: 0, kind: input, shape index: {}]
  %s1 = inlined_call_operand.vmem [shape: f32[1,256], index: 1, kind: output, shape index: {}]
  $region1: #{tile.19} parent=0
    #allocation0 [shape = 'u8[8192]{0}', space=vmem, size = 0x2000, scoped, tag = 'scoped mem for output reshape']
    %s2 = smov 3
    %v3 = vld [vmem:[%s0] ss:$8 sm:%s2]
    %vm4 = vcmask 130048
    %5 = vst.msk [vmem:[#allocation0] ss:$8 sm:$0x3] %vm4, %v3
    %s6 = scalar_lea.vmem %s0, 7
    %s7 = smov 3
    %v8 = vld [vmem:[%s6] ss:$8 sm:%s7]
    %9 = vrot.lane.b32.xlu0 %v8, 112
    %v10 = vpop.permute.xlu0 %9
    %vm11 = vcmask 1048448
    %12 = vst.msk [vmem:[#allocation0] ss:$8 sm:$0x3] %vm11, %v10
    %s13 = scalar_lea.vmem %s0, 6
    %s14 = smov 3
    %v15 = vld [vmem:[%s13] ss:$8 sm:%s14]
    %16 = vrot.lane.b32.xlu0 %v15, 96
    %v17 = vpop.permute.xlu0 %16
    %vm18 = vcmask 917248
    %19 = vst.msk [vmem:[#allocation0] ss:$8 sm:$0x3] %vm18, %v17
    %s20 = scalar_lea.vmem %s0, 5
    %s21 = smov 3
    %v22 = vld [vmem:[%s20] ss:$8 sm:%s21]
    %23 = vrot.lane.b32.xlu0 %v22, 80
    %v24 = vpop.permute.xlu0 %23
    %vm25 = vcmask 786048
    %26 = vst.msk [vmem:[#allocation0] ss:$8 sm:$0x3] %vm25, %v24
    %s27 = scalar_lea.vmem %s0, 4
    %s28 = smov 3
    %v29 = vld [vmem:[%s27] ss:$8 sm:%s28]
    %30 = vrot.lane.b32.xlu0 %v29, 64
    %v31 = vpop.permute.xlu0 %30
    %vm32 = vcmask 654848
    %33 = vst.msk [vmem:[#allocation0] ss:$8 sm:$0x3] %vm32, %v31
    %s34 = scalar_lea.vmem %s0, 3
    %s35 = smov 3
    %v36 = vld [vmem:[%s34] ss:$8 sm:%s35]
    %37 = vrot.lane.b32.xlu0 %v36, 48
    %v38 = vpop.permute.xlu0 %37
    %vm39 = vcmask 523648
    %40 = vst.msk [vmem:[#allocation0] ss:$8 sm:$0x3] %vm39, %v38
    %s41 = scalar_lea.vmem %s0, 2
    %s42 = smov 3
    %v43 = vld [vmem:[%s41] ss:$8 sm:%s42]
    %44 = vrot.lane.b32.xlu0 %v43, 32
    %v45 = vpop.permute.xlu0 %44
    %vm46 = vcmask 392448
    %47 = vst.msk [vmem:[#allocation0] ss:$8 sm:$0x3] %vm46, %v45
    %s48 = scalar_lea.vmem %s0, 1
    %s49 = smov 3
    %v50 = vld [vmem:[%s48] ss:$8 sm:%s49]
    %51 = vrot.lane.b32.xlu0 %v50, 16
    %v52 = vpop.permute.xlu0 %51
    %vm53 = vcmask 261248
    %54 = vst.msk [vmem:[#allocation0] ss:$8 sm:$0x3] %vm53, %v52
    %s56 = ssub.s32 2, 1
    %v57 = vld [vmem:[#allocation0] sm:%s56]
    %s59 = ssub.s32 2, 1
    %60 = vst [vmem:[%s1] sm:%s59] %v57
    %s61 = scalar_lea.vmem [#allocation0], 8
    %v62 = vld [vmem:[%s61] sm:%s56]
    %s64 = ssub.s32 2, 1
    %s65 = scalar_lea.vmem %s1, 1
    %66 = vst [vmem:[%s65] sm:%s64] %v62

// kernel: super_resolution_forward.1
$region0: #{super_resolution_forward.1}
  #allocation0 [shape = 'u32[]', space=smem, size = 0x4, offset = 0x4, fixed_abs, tag = 'smem constant byte address 0x4 - core index']
  #allocation1 [shape = 'u32[72,128]{1,0:T(1,128)}', space=vmem, size = 0x9000, scoped, tag = 'internal scratch']
  #allocation2 [shape = 'f32[1,1]{1,0:T(1,128)S(1)}', space=vmem, size = 0x200, scoped, tag = 'scoped memory for super_resolution_forward.1']
  %s0 = inlined_call_operand.vmem [shape: f32[2,16,16], index: 0, kind: input, shape index: {}]
  %s1 = inlined_call_operand.vmem [shape: f32[9,16,512], index: 1, kind: input, shape index: {}]
  %s2 = inlined_call_operand.vmem [shape: f32[1,512], index: 2, kind: input, shape index: {}]
  %s3 = inlined_call_operand.vmem [shape: f32[512,256], index: 3, kind: input, shape index: {}]
  %s4 = inlined_call_operand.vmem [shape: f32[1,256], index: 4, kind: input, shape index: {}]
  %s5 = inlined_call_operand.vmem [shape: f32[1280,16], index: 5, kind: input, shape index: {}]
  %s6 = inlined_call_operand.<no memory space> [shape: f32[1,1], index: 6, kind: input, shape index: {}]
  %s7 = inlined_call_operand.hbm [shape: f32[2,16,16], index: 7, kind: output, shape index: {}]
  %s8 = sld [smem:[#allocation0]]
  $region61: #{super_resolution_forward.1} parent=0
    _
  %s10 = ssub.s32 1, %s8
  %s11 = scalar_select 0, %s10, %s8
  %v12 = vstv %s6
  %13 = vst [vmem:[#allocation2] sm:$0x1] %v12
  $region1: #{super_resolution_forward.1} parent=0
    #allocation3 [shape = 'u8[16384]{0}', space=vmem, size = 0x4000, scoped, tag = 'output window, operand 0']
    #allocation4 [shape = 's32[2]{0}', space=sflag, size = 0x8, scoped, tag = 'scoped memory for super_resolution_forward.1']
    %14 = vsyncpa [#allocation4], 0
    %s15 = scalar_lea.sflag [#allocation4], 1
    %16 = vsyncpa %s15, 0
    loop: start=0, step=1, limit=4
    $region2: #{super_resolution_forward.1} parent=1 // loop_pre_header
      _
    $region3: #{super_resolution_forward.1} parent=1 // loop_header
      %s18 = sphi 0, %s22
      %p19 = scmp.ge.s32.totalorder %s18, 4
      %s28 = sphi 0, %s30
      %s31 = sphi 0, %s28
      %s32 = sphi 0, %s31
      %s48 = sphi 0, %s32
      %s52 = sphi 0, %s52
      %s54 = sphi 0, %s52
      %s55 = sphi 0, %s54
      %s69 = sphi 0, %s55
      %s73 = sphi 0, %s73
      %s75 = sphi 0, %s73
      %s76 = sphi 0, %s75
      %s90 = sphi 0, %s76
      %s94 = sphi 0, %s94
      %s96 = sphi 0, %s94
      %s97 = sphi 0, %s96
      %s111 = sphi 0, %s97
      %s115 = sphi 0, %s115
      %s117 = sphi 0, %s115
      %s118 = sphi 0, %s117
      %s132 = sphi 0, %s118
      %s136 = sphi 0, %s136
      %s138 = sphi 0, %s136
      %s139 = sphi 0, %s138
      %s153 = sphi 0, %s139
      %s157 = sphi 0, %s157
      %s159 = sphi 0, %s157
      %s160 = sphi 0, %s159
      %s174 = sphi 0, %s160
      %s180 = sphi 0, %s182
      %s183 = sphi 0, %s180
      %s184 = sphi 0, %s183
      %s200 = sphi 0, %s184
    $region4: #{super_resolution_forward.1} parent=1 // loop_header_branch
      %21 = sbr.rel (%p19) target = $region8
    $region5: #{super_resolution_forward.1} parent=1 // loop_body
      %s23 = ssub.s32 %s18, 1
      %s24 = ssub.s32 %s18, 2
      %s25 = sadd.s32 %s18, 1
      %s26 = ssub.s32 %s18, %s25
      %p27 = scmp.eq.s32.totalorder %s26, 0
      %s29 = sadd.s32 %s28, 1
      %s30 = scalar_select %p27, %s28, %s29
      %p33 = pneg %p27
      %p34 = scmp.eq.s32.totalorder %s18, 1
      %p35 = por %p33, %p34
      %p36 = scmp.ne.s32.totalorder %s28, %s31
      %p37 = scmp.eq.s32.totalorder %s18, 0
      %p38 = por %p36, %p37
      %p39 = scmp.ne.s32.totalorder %s28, %s31
      %p40 = scmp.eq.s32.totalorder %s23, 1
      %p41 = por %p39, %p40
      %p42 = scmp.ne.s32.totalorder %s31, %s32
      %p43 = scmp.eq.s32.totalorder %s23, 0
      %p44 = por %p42, %p43
      %p45 = scmp.ne.s32.totalorder %s31, %s32
      %p46 = scmp.eq.s32.totalorder %s24, 1
      %p47 = por %p45, %p46
      %p49 = scmp.ne.s32.totalorder %s32, %s48
      %p50 = scmp.eq.s32.totalorder %s24, 0
      %p51 = por %p49, %p50
      %s53 = sadd.s32 %s52, 1
      %p56 = scmp.eq.s32.totalorder %s18, 1
      %p57 = scmp.ne.s32.totalorder %s52, %s54
      %p58 = scmp.eq.s32.totalorder %s18, 0
      %p59 = por %p57, %p58
      %p60 = scmp.ne.s32.totalorder %s52, %s54
      %p61 = scmp.eq.s32.totalorder %s23, 1
      %p62 = por %p60, %p61
      %p63 = scmp.ne.s32.totalorder %s54, %s55
      %p64 = scmp.eq.s32.totalorder %s23, 0
      %p65 = por %p63, %p64
      %p66 = scmp.ne.s32.totalorder %s54, %s55
      %p67 = scmp.eq.s32.totalorder %s24, 1
      %p68 = por %p66, %p67
      %p70 = scmp.ne.s32.totalorder %s55, %s69
      %p71 = scmp.eq.s32.totalorder %s24, 0
      %p72 = por %p70, %p71
      %s74 = sadd.s32 %s73, 1
      %p77 = scmp.eq.s32.totalorder %s18, 1
      %p78 = scmp.ne.s32.totalorder %s73, %s75
      %p79 = scmp.eq.s32.totalorder %s18, 0
      %p80 = por %p78, %p79
      %p81 = scmp.ne.s32.totalorder %s73, %s75
      %p82 = scmp.eq.s32.totalorder %s23, 1
      %p83 = por %p81, %p82
      %p84 = scmp.ne.s32.totalorder %s75, %s76
      %p85 = scmp.eq.s32.totalorder %s23, 0
      %p86 = por %p84, %p85
      %p87 = scmp.ne.s32.totalorder %s75, %s76
      %p88 = scmp.eq.s32.totalorder %s24, 1
      %p89 = por %p87, %p88
      %p91 = scmp.ne.s32.totalorder %s76, %s90
      %p92 = scmp.eq.s32.totalorder %s24, 0
      %p93 = por %p91, %p92
      %s95 = sadd.s32 %s94, 1
      %p98 = scmp.eq.s32.totalorder %s18, 1
      %p99 = scmp.ne.s32.totalorder %s94, %s96
      %p100 = scmp.eq.s32.totalorder %s18, 0
      %p101 = por %p99, %p100
      %p102 = scmp.ne.s32.totalorder %s94, %s96
      %p103 = scmp.eq.s32.totalorder %s23, 1
      %p104 = por %p102, %p103
      %p105 = scmp.ne.s32.totalorder %s96, %s97
      %p106 = scmp.eq.s32.totalorder %s23, 0
      %p107 = por %p105, %p106
      %p108 = scmp.ne.s32.totalorder %s96, %s97
      %p109 = scmp.eq.s32.totalorder %s24, 1
      %p110 = por %p108, %p109
      %p112 = scmp.ne.s32.totalorder %s97, %s111
      %p113 = scmp.eq.s32.totalorder %s24, 0
      %p114 = por %p112, %p113
      %s116 = sadd.s32 %s115, 1
      %p119 = scmp.eq.s32.totalorder %s18, 1
      %p120 = scmp.ne.s32.totalorder %s115, %s117
      %p121 = scmp.eq.s32.totalorder %s18, 0
      %p122 = por %p120, %p121
      %p123 = scmp.ne.s32.totalorder %s115, %s117
      %p124 = scmp.eq.s32.totalorder %s23, 1
      %p125 = por %p123, %p124
      %p126 = scmp.ne.s32.totalorder %s117, %s118
      %p127 = scmp.eq.s32.totalorder %s23, 0
      %p128 = por %p126, %p127
      %p129 = scmp.ne.s32.totalorder %s117, %s118
      %p130 = scmp.eq.s32.totalorder %s24, 1
      %p131 = por %p129, %p130
      %p133 = scmp.ne.s32.totalorder %s118, %s132
      %p134 = scmp.eq.s32.totalorder %s24, 0
      %p135 = por %p133, %p134
      %s137 = sadd.s32 %s136, 1
      %p140 = scmp.eq.s32.totalorder %s18, 1
      %p141 = scmp.ne.s32.totalorder %s136, %s138
      %p142 = scmp.eq.s32.totalorder %s18, 0
      %p143 = por %p141, %p142
      %p144 = scmp.ne.s32.totalorder %s136, %s138
      %p145 = scmp.eq.s32.totalorder %s23, 1
      %p146 = por %p144, %p145
      %p147 = scmp.ne.s32.totalorder %s138, %s139
      %p148 = scmp.eq.s32.totalorder %s23, 0
      %p149 = por %p147, %p148
      %p150 = scmp.ne.s32.totalorder %s138, %s139
      %p151 = scmp.eq.s32.totalorder %s24, 1
      %p152 = por %p150, %p151
      %p154 = scmp.ne.s32.totalorder %s139, %s153
      %p155 = scmp.eq.s32.totalorder %s24, 0
      %p156 = por %p154, %p155
      %s158 = sadd.s32 %s157, 1
      %p161 = scmp.eq.s32.totalorder %s18, 1
      %p162 = scmp.ne.s32.totalorder %s157, %s159
      %p163 = scmp.eq.s32.totalorder %s18, 0
      %p164 = por %p162, %p163
      %p165 = scmp.ne.s32.totalorder %s157, %s159
      %p166 = scmp.eq.s32.totalorder %s23, 1
      %p167 = por %p165, %p166
      %p168 = scmp.ne.s32.totalorder %s159, %s160
      %p169 = scmp.eq.s32.totalorder %s23, 0
      %p170 = por %p168, %p169
      %p171 = scmp.ne.s32.totalorder %s159, %s160
      %p172 = scmp.eq.s32.totalorder %s24, 1
      %p173 = por %p171, %p172
      %p175 = scmp.ne.s32.totalorder %s160, %s174
      %p176 = scmp.eq.s32.totalorder %s24, 0
      %p177 = por %p175, %p176
      %s178 = ssub.s32 %s18, %s25
      %p179 = scmp.eq.s32.totalorder %s178, 0
      %s181 = sadd.s32 %s180, 1
      %s182 = scalar_select %p179, %s180, %s181
      %p185 = pneg %p179
      %p186 = scmp.eq.s32.totalorder %s18, 1
      %p187 = por %p185, %p186
      %p188 = scmp.ne.s32.totalorder %s180, %s183
      %p189 = scmp.eq.s32.totalorder %s18, 0
      %p190 = por %p188, %p189
      %p191 = scmp.ne.s32.totalorder %s180, %s183
      %p192 = scmp.eq.s32.totalorder %s23, 1
      %p193 = por %p191, %p192
      %p194 = scmp.ne.s32.totalorder %s183, %s184
      %p195 = scmp.eq.s32.totalorder %s23, 0
      %p196 = por %p194, %p195
      %p197 = scmp.ne.s32.totalorder %s183, %s184
      %p198 = scmp.eq.s32.totalorder %s24, 1
      %p199 = por %p197, %p198
      %p201 = scmp.ne.s32.totalorder %s184, %s200
      %p202 = scmp.eq.s32.totalorder %s24, 0
      %p203 = por %p201, %p202
      %p204 = scmp.le.s32.totalorder 1, %s18
      %p205 = scmp.lt.s32.totalorder %s18, 3
      %p206 = pnand %p204, %p205
      %p207 = pneg %p206
      // Predicated region
      $region9: #{super_resolution_forward.1} parent=5 // pred_check
        _
      $region10: #{super_resolution_forward.1} parent=5 // pred_check_branch
        %209 = sbr.rel (%p206) target = $region12
      $region11: #{super_resolution_forward.1} parent=5 // pred_region
        %s210 = ssub.s32 %s18, 1
        // Predicated region
        $region13: #{super_resolution_forward.1} parent=11 // pred_check
          %p211 = pneg %p65
        $region14: #{super_resolution_forward.1} parent=11 // pred_check_branch
          %213 = sbr.rel (%p211) target = $region16
        $region15: #{super_resolution_forward.1} parent=11 // pred_region
          _
        $region16: #{super_resolution_forward.1} parent=11 // pred_fallthru
          _
        // Predicated region
        $region17: #{super_resolution_forward.1} parent=11 // pred_check
          %p214 = pneg %p86
        $region18: #{super_resolution_forward.1} parent=11 // pred_check_branch
          %216 = sbr.rel (%p214) target = $region20
        $region19: #{super_resolution_forward.1} parent=11 // pred_region
          _
        $region20: #{super_resolution_forward.1} parent=11 // pred_fallthru
          _
        // Predicated region
        $region21: #{super_resolution_forward.1} parent=11 // pred_check
          %p217 = pneg %p107
        $region22: #{super_resolution_forward.1} parent=11 // pred_check_branch
          %219 = sbr.rel (%p217) target = $region24
        $region23: #{super_resolution_forward.1} parent=11 // pred_region
          _
        $region24: #{super_resolution_forward.1} parent=11 // pred_fallthru
          _
        // Predicated region
        $region25: #{super_resolution_forward.1} parent=11 // pred_check
          %p220 = pneg %p128
        $region26: #{super_resolution_forward.1} parent=11 // pred_check_branch
          %222 = sbr.rel (%p220) target = $region28
        $region27: #{super_resolution_forward.1} parent=11 // pred_region
          _
        $region28: #{super_resolution_forward.1} parent=11 // pred_fallthru
          _
        // Predicated region
        $region29: #{super_resolution_forward.1} parent=11 // pred_check
          %p223 = pneg %p149
        $region30: #{super_resolution_forward.1} parent=11 // pred_check_branch
          %225 = sbr.rel (%p223) target = $region32
        $region31: #{super_resolution_forward.1} parent=11 // pred_region
          _
        $region32: #{super_resolution_forward.1} parent=11 // pred_fallthru
          _
        // Predicated region
        $region33: #{super_resolution_forward.1} parent=11 // pred_check
          %p226 = pneg %p170
        $region34: #{super_resolution_forward.1} parent=11 // pred_check_branch
          %228 = sbr.rel (%p226) target = $region36
        $region35: #{super_resolution_forward.1} parent=11 // pred_region
          _
        $region36: #{super_resolution_forward.1} parent=11 // pred_fallthru
          _
      $region12: #{super_resolution_forward.1} parent=5 // pred_fallthru
        _
      %p229 = scmp.lt.s32.totalorder %s18, 2
      // Predicated region
      $region37: #{super_resolution_forward.1} parent=5 // pred_check
        %p230 = pneg %p229
      $region38: #{super_resolution_forward.1} parent=5 // pred_check_branch
        %232 = sbr.rel (%p230) target = $region40
      $region39: #{super_resolution_forward.1} parent=5 // pred_region
        // Predicated region
        $region41: #{super_resolution_forward.1} parent=39 // pred_check
          %p233 = pneg %p38
        $region42: #{super_resolution_forward.1} parent=39 // pred_check_branch
          %235 = sbr.rel (%p233) target = $region44
        $region43: #{super_resolution_forward.1} parent=39 // pred_region
          %p236 = scmp.lt.s32.totalorder %s18, 1
          %s237 = scalar_select %p236, %s18, 1
          %s238 = smul.addr %s237, 2
          %s239 = smul.addr %s238, 8
          %s240 = scalar_lea.vmem %s0, %s239
        $region44: #{super_resolution_forward.1} parent=39 // pred_fallthru
          _
      $region40: #{super_resolution_forward.1} parent=5 // pred_fallthru
        _
      %p241 = scmp.le.s32.totalorder 1, %s18
      %p242 = scmp.lt.s32.totalorder %s18, 3
      %p243 = pnand %p241, %p242
      %p244 = pneg %p243
      // Predicated region
      $region45: #{super_resolution_forward.1} parent=5 // pred_check
        _
      $region46: #{super_resolution_forward.1} parent=5 // pred_check_branch
        %246 = sbr.rel (%p243) target = $region48
      $region47: #{super_resolution_forward.1} parent=5 // pred_region
        %s247 = ssub.s32 %s18, 1
        %p248 = scmp.lt.s32.totalorder %s23, 1
        %s249 = scalar_select %p248, %s23, 1
        %s250 = smul.addr %s249, 2
        %s251 = smul.addr %s250, 8
        %s252 = scalar_lea.vmem %s0, %s251
        %p253 = pneg %p44
        %p254 = pneg %p41
        %p255 = pneg %p65
        %p256 = pneg %p62
        %p257 = pneg %p86
        %p258 = pneg %p83
        %p259 = pneg %p107
        %p260 = pneg %p104
        %p261 = pneg %p128
        %p262 = pneg %p125
        %p263 = pneg %p149
        %p264 = pneg %p146
        %p265 = pneg %p170
        %p266 = pneg %p167
        %p267 = pneg %p196
        %p268 = pneg %p193
        %s269 = sand.u32 %s183, 1
        %s270 = scalar_lea.sflag [#allocation4], %s269
        %s271 = sand.u32 %s183, 1
        %s272 = smul.addr %s271, 16
        %s273 = scalar_lea.vmem [#allocation3], %s272
        %p274 = scmp.lt.s32.totalorder %s23, 1
        %s275 = scalar_select %p274, %s23, 1
        %s276 = smul.addr %s275, 2
        %s277 = smul.addr %s276, 8
        %s278 = scalar_lea.vmem %s0, %s277
        %v279 = vld [vmem:[%s278] sm:$0xff]
        %v280 = vld [vmem:[%s278 + $0x8] sm:$0xff]
        %vm283 = vcmask 1043456
        %v284 = vrot.slane %v279, 4
        %v285 = vrot.slane %v280, 4
        %v286 = vsel %vm283, %v284, %v285
        %v289 = vsel %vm283, 0.0, %v284
        %v290 = vsel %vm283, %v285, 0.0
        %v291 = vld [vmem:[%s1] sm:$0xff]
        %v292 = vld [vmem:[%s1 + $0x8] sm:$0xff]
        %v293 = vld [vmem:[%s1 + $0x10] sm:$0xff]
        %v294 = vld [vmem:[%s1 + $0x18] sm:$0xff]
        %v295 = vld [vmem:[%s1 + $0x20] sm:$0xff]
        %v296 = vld [vmem:[%s1 + $0x28] sm:$0xff]
        %v297 = vld [vmem:[%s1 + $0x30] sm:$0xff]
        %v298 = vld [vmem:[%s1 + $0x38] sm:$0xff]
        %s299 = scalar_lea.vmem %s1, 64
        %v300 = vld [vmem:[%s299] sm:$0xff]
        %v301 = vld [vmem:[%s299 + $0x8] sm:$0xff]
        %v302 = vld [vmem:[%s299 + $0x10] sm:$0xff]
        %v303 = vld [vmem:[%s299 + $0x18] sm:$0xff]
        %v304 = vld [vmem:[%s299 + $0x20] sm:$0xff]
        %v305 = vld [vmem:[%s299 + $0x28] sm:$0xff]
        %v306 = vld [vmem:[%s299 + $0x30] sm:$0xff]
        %v307 = vld [vmem:[%s299 + $0x38] sm:$0xff]
        %vm310 = vcmask 1046528
        %v311 = vrot.slane %v289, 1
        %v312 = vrot.slane %v286, 1
        %v313 = vsel %vm310, %v311, %v312
        %v314 = vrot.slane %v290, 1
        %v315 = vsel %vm310, %v312, %v314
        %vm316 = vcmask 130048
        %v317 = vsel %vm316, %v313, 0
        %v319 = vsel %vm316, %v315, 0
        %321 = vmatpush.msra.mxu0 0.0
        %322 = vmatpush.msra.mxu0 0.0
        %323 = vmatpush.msra.mxu0 0.0
        %324 = vmatpush.msra.mxu0 0.0
        %325 = vmatpush.msra.mxu0 0.0
        %326 = vmatpush.msra.mxu0 0.0
        %327 = vmatpush.msra.mxu0 0.0
        %328 = vmatpush.msra.mxu0 0.0
        %329 = vmatpush.msra.mxu0 0.0
        %330 = vmatpush.msra.mxu0 0.0
        %331 = vmatpush.msra.mxu0 0.0
        %332 = vmatpush.msra.mxu0 0.0
        %333 = vmatpush.msra.mxu0 0.0
        %334 = vmatpush.msra.mxu0 0.0
        %335 = vmatpush.msra.mxu0 %v304
        %336 = vmatpush.msra.mxu0 %v300
        %337 = vmatmul.f32.gmra.mxu0 %v317
        %v338 = vpop.f32.mrf.mxu0
        %v339 = vadd.f32 0.0, %v338
        %340 = vmatmul.f32.gmra.mxu0 %v319
        %v341 = vpop.f32.mrf.mxu0
        %v342 = vadd.f32 0.0, %v341
        %343 = vdwg.mxu0
        %344 = vmatpush.msra.mxu0 0.0
        %345 = vmatpush.msra.mxu0 0.0
        %346 = vmatpush.msra.mxu0 0.0
        %347 = vmatpush.msra.mxu0 0.0
        %348 = vmatpush.msra.mxu0 0.0
        %349 = vmatpush.msra.mxu0 0.0
        %350 = vmatpush.msra.mxu0 0.0
        %351 = vmatpush.msra.mxu0 0.0
        %352 = vmatpush.msra.mxu0 0.0
        %353 = vmatpush.msra.mxu0 0.0
        %354 = vmatpush.msra.mxu0 0.0
        %355 = vmatpush.msra.mxu0 0.0
        %356 = vmatpush.msra.mxu0 0.0
        %357 = vmatpush.msra.mxu0 0.0
        %358 = vmatpush.msra.mxu0 %v305
        %359 = vmatpush.msra.mxu0 %v301
        %360 = vmatmul.f32.gmra.mxu0 %v317
        %v361 = vpop.f32.mrf.mxu0
        %v362 = vadd.f32 0.0, %v361
        %363 = vmatmul.f32.gmra.mxu0 %v319
        %v364 = vpop.f32.mrf.mxu0
        %v365 = vadd.f32 0.0, %v364
        %366 = vdwg.mxu0
        %367 = vmatpush.msra.mxu0 0.0
        %368 = vmatpush.msra.mxu0 0.0
        %369 = vmatpush.msra.mxu0 0.0
        %370 = vmatpush.msra.mxu0 0.0
        %371 = vmatpush.msra.mxu0 0.0
        %372 = vmatpush.msra.mxu0 0.0
        %373 = vmatpush.msra.mxu0 0.0
        %374 = vmatpush.msra.mxu0 0.0
        %375 = vmatpush.msra.mxu0 0.0
        %376 = vmatpush.msra.mxu0 0.0
        %377 = vmatpush.msra.mxu0 0.0
        %378 = vmatpush.msra.mxu0 0.0
        %379 = vmatpush.msra.mxu0 0.0
        %380 = vmatpush.msra.mxu0 0.0
        %381 = vmatpush.msra.mxu0 %v306
        %382 = vmatpush.msra.mxu0 %v302
        %383 = vmatmul.f32.gmra.mxu0 %v317
        %v384 = vpop.f32.mrf.mxu0
        %v385 = vadd.f32 0.0, %v384
        %386 = vmatmul.f32.gmra.mxu0 %v319
        %v387 = vpop.f32.mrf.mxu0
        %v388 = vadd.f32 0.0, %v387
        %389 = vdwg.mxu0
        %390 = vmatpush.msra.mxu0 0.0
        %391 = vmatpush.msra.mxu0 0.0
        %392 = vmatpush.msra.mxu0 0.0
        %393 = vmatpush.msra.mxu0 0.0
        %394 = vmatpush.msra.mxu0 0.0
        %395 = vmatpush.msra.mxu0 0.0
        %396 = vmatpush.msra.mxu0 0.0
        %397 = vmatpush.msra.mxu0 0.0
        %398 = vmatpush.msra.mxu0 0.0
        %399 = vmatpush.msra.mxu0 0.0
        %400 = vmatpush.msra.mxu0 0.0
        %401 = vmatpush.msra.mxu0 0.0
        %402 = vmatpush.msra.mxu0 0.0
        %403 = vmatpush.msra.mxu0 0.0
        %404 = vmatpush.msra.mxu0 %v307
        %405 = vmatpush.msra.mxu0 %v303
        %406 = vmatmul.f32.gmra.mxu0 %v317
        %v407 = vpop.f32.mrf.mxu0
        %v408 = vadd.f32 0.0, %v407
        %409 = vmatmul.f32.gmra.mxu0 %v319
        %v410 = vpop.f32.mrf.mxu0
        %v411 = vadd.f32 0.0, %v410
        %412 = vdwg.mxu0
        %v413 = vsel %vm316, %v289, 0
        %v415 = vsel %vm316, %v286, 0
        %417 = vmatpush.msra.mxu0 0.0
        %418 = vmatpush.msra.mxu0 0.0
        %419 = vmatpush.msra.mxu0 0.0
        %420 = vmatpush.msra.mxu0 0.0
        %421 = vmatpush.msra.mxu0 0.0
        %422 = vmatpush.msra.mxu0 0.0
        %423 = vmatpush.msra.mxu0 0.0
        %424 = vmatpush.msra.mxu0 0.0
        %425 = vmatpush.msra.mxu0 0.0
        %426 = vmatpush.msra.mxu0 0.0
        %427 = vmatpush.msra.mxu0 0.0
        %428 = vmatpush.msra.mxu0 0.0
        %429 = vmatpush.msra.mxu0 0.0
        %430 = vmatpush.msra.mxu0 0.0
        %431 = vmatpush.msra.mxu0 %v295
        %432 = vmatpush.msra.mxu0 %v291
        %433 = vmatmul.f32.gmra.mxu0 %v413
        %v434 = vpop.f32.mrf.mxu0
        %v435 = vadd.f32 %v339, %v434
        %436 = vmatmul.f32.gmra.mxu0 %v415
        %v437 = vpop.f32.mrf.mxu0
        %v438 = vadd.f32 %v342, %v437
        %439 = vdwg.mxu0
        %440 = vmatpush.msra.mxu0 0.0
        %441 = vmatpush.msra.mxu0 0.0
        %442 = vmatpush.msra.mxu0 0.0
        %443 = vmatpush.msra.mxu0 0.0
        %444 = vmatpush.msra.mxu0 0.0
        %445 = vmatpush.msra.mxu0 0.0
        %446 = vmatpush.msra.mxu0 0.0
        %447 = vmatpush.msra.mxu0 0.0
        %448 = vmatpush.msra.mxu0 0.0
        %449 = vmatpush.msra.mxu0 0.0
        %450 = vmatpush.msra.mxu0 0.0
        %451 = vmatpush.msra.mxu0 0.0
        %452 = vmatpush.msra.mxu0 0.0
        %453 = vmatpush.msra.mxu0 0.0
        %454 = vmatpush.msra.mxu0 %v296
        %455 = vmatpush.msra.mxu0 %v292
        %456 = vmatmul.f32.gmra.mxu0 %v413
        %v457 = vpop.f32.mrf.mxu0
        %v458 = vadd.f32 %v362, %v457
        %459 = vmatmul.f32.gmra.mxu0 %v415
        %v460 = vpop.f32.mrf.mxu0
        %v461 = vadd.f32 %v365, %v460
        %462 = vdwg.mxu0
        %463 = vmatpush.msra.mxu0 0.0
        %464 = vmatpush.msra.mxu0 0.0
        %465 = vmatpush.msra.mxu0 0.0
        %466 = vmatpush.msra.mxu0 0.0
        %467 = vmatpush.msra.mxu0 0.0
        %468 = vmatpush.msra.mxu0 0.0
        %469 = vmatpush.msra.mxu0 0.0
        %470 = vmatpush.msra.mxu0 0.0
        %471 = vmatpush.msra.mxu0 0.0
        %472 = vmatpush.msra.mxu0 0.0
        %473 = vmatpush.msra.mxu0 0.0
        %474 = vmatpush.msra.mxu0 0.0
        %475 = vmatpush.msra.mxu0 0.0
        %476 = vmatpush.msra.mxu0 0.0
        %477 = vmatpush.msra.mxu0 %v297
        %478 = vmatpush.msra.mxu0 %v293
        %479 = vmatmul.f32.gmra.mxu0 %v413
        %v480 = vpop.f32.mrf.mxu0
        %v481 = vadd.f32 %v385, %v480
        %482 = vmatmul.f32.gmra.mxu0 %v415
        %v483 = vpop.f32.mrf.mxu0
        %v484 = vadd.f32 %v388, %v483
        %485 = vdwg.mxu0
        %486 = vmatpush.msra.mxu0 0.0
        %487 = vmatpush.msra.mxu0 0.0
        %488 = vmatpush.msra.mxu0 0.0
        %489 = vmatpush.msra.mxu0 0.0
        %490 = vmatpush.msra.mxu0 0.0
        %491 = vmatpush.msra.mxu0 0.0
        %492 = vmatpush.msra.mxu0 0.0
        %493 = vmatpush.msra.mxu0 0.0
        %494 = vmatpush.msra.mxu0 0.0
        %495 = vmatpush.msra.mxu0 0.0
        %496 = vmatpush.msra.mxu0 0.0
        %497 = vmatpush.msra.mxu0 0.0
        %498 = vmatpush.msra.mxu0 0.0
        %499 = vmatpush.msra.mxu0 0.0
        %500 = vmatpush.msra.mxu0 %v298
        %501 = vmatpush.msra.mxu0 %v294
        %502 = vmatmul.f32.gmra.mxu0 %v413
        %v503 = vpop.f32.mrf.mxu0
        %v504 = vadd.f32 %v408, %v503
        %505 = vmatmul.f32.gmra.mxu0 %v415
        %v506 = vpop.f32.mrf.mxu0
        %v507 = vadd.f32 %v411, %v506
        %508 = vdwg.mxu0
        %s509 = scalar_lea.vmem %s1, 128
        %v510 = vld [vmem:[%s509] sm:$0xff]
        %v511 = vld [vmem:[%s509 + $0x8] sm:$0xff]
        %v512 = vld [vmem:[%s509 + $0x10] sm:$0xff]
        %v513 = vld [vmem:[%s509 + $0x18] sm:$0xff]
        %v514 = vld [vmem:[%s509 + $0x20] sm:$0xff]
        %v515 = vld [vmem:[%s509 + $0x28] sm:$0xff]
        %v516 = vld [vmem:[%s509 + $0x30] sm:$0xff]
        %v517 = vld [vmem:[%s509 + $0x38] sm:$0xff]
        %vm518 = vcmask 1045504
        %v519 = vrot.slane %v289, 2
        %v520 = vrot.slane %v286, 2
        %v521 = vsel %vm518, %v519, %v520
        %v522 = vrot.slane %v290, 2
        %v523 = vsel %vm518, %v520, %v522
        %v524 = vsel %vm316, %v521, 0
        %v526 = vsel %vm316, %v523, 0
        %528 = vmatpush.msra.mxu0 0.0
        %529 = vmatpush.msra.mxu0 0.0
        %530 = vmatpush.msra.mxu0 0.0
        %531 = vmatpush.msra.mxu0 0.0
        %532 = vmatpush.msra.mxu0 0.0
        %533 = vmatpush.msra.mxu0 0.0
        %534 = vmatpush.msra.mxu0 0.0
        %535 = vmatpush.msra.mxu0 0.0
        %536 = vmatpush.msra.mxu0 0.0
        %537 = vmatpush.msra.mxu0 0.0
        %538 = vmatpush.msra.mxu0 0.0
        %539 = vmatpush.msra.mxu0 0.0
        %540 = vmatpush.msra.mxu0 0.0
        %541 = vmatpush.msra.mxu0 0.0
        %542 = vmatpush.msra.mxu0 %v514
        %543 = vmatpush.msra.mxu0 %v510
        %544 = vmatmul.f32.gmra.mxu0 %v524
        %v545 = vpop.f32.mrf.mxu0
        %v546 = vadd.f32 0.0, %v545
        %547 = vmatmul.f32.gmra.mxu0 %v526
        %v548 = vpop.f32.mrf.mxu0
        %v549 = vadd.f32 0.0, %v548
        %550 = vdwg.mxu0
        %551 = vmatpush.msra.mxu0 0.0
        %552 = vmatpush.msra.mxu0 0.0
        %553 = vmatpush.msra.mxu0 0.0
        %554 = vmatpush.msra.mxu0 0.0
        %555 = vmatpush.msra.mxu0 0.0
        %556 = vmatpush.msra.mxu0 0.0
        %557 = vmatpush.msra.mxu0 0.0
        %558 = vmatpush.msra.mxu0 0.0
        %559 = vmatpush.msra.mxu0 0.0
        %560 = vmatpush.msra.mxu0 0.0
        %561 = vmatpush.msra.mxu0 0.0
        %562 = vmatpush.msra.mxu0 0.0
        %563 = vmatpush.msra.mxu0 0.0
        %564 = vmatpush.msra.mxu0 0.0
        %565 = vmatpush.msra.mxu0 %v515
        %566 = vmatpush.msra.mxu0 %v511
        %567 = vmatmul.f32.gmra.mxu0 %v524
        %v568 = vpop.f32.mrf.mxu0
        %v569 = vadd.f32 0.0, %v568
        %570 = vmatmul.f32.gmra.mxu0 %v526
        %v571 = vpop.f32.mrf.mxu0
        %v572 = vadd.f32 0.0, %v571
        %573 = vdwg.mxu0
        %574 = vmatpush.msra.mxu0 0.0
        %575 = vmatpush.msra.mxu0 0.0
        %576 = vmatpush.msra.mxu0 0.0
        %577 = vmatpush.msra.mxu0 0.0
        %578 = vmatpush.msra.mxu0 0.0
        %579 = vmatpush.msra.mxu0 0.0
        %580 = vmatpush.msra.mxu0 0.0
        %581 = vmatpush.msra.mxu0 0.0
        %582 = vmatpush.msra.mxu0 0.0
        %583 = vmatpush.msra.mxu0 0.0
        %584 = vmatpush.msra.mxu0 0.0
        %585 = vmatpush.msra.mxu0 0.0
        %586 = vmatpush.msra.mxu0 0.0
        %587 = vmatpush.msra.mxu0 0.0
        %588 = vmatpush.msra.mxu0 %v516
        %589 = vmatpush.msra.mxu0 %v512
        %590 = vmatmul.f32.gmra.mxu0 %v524
        %v591 = vpop.f32.mrf.mxu0
        %v592 = vadd.f32 0.0, %v591
        %593 = vmatmul.f32.gmra.mxu0 %v526
        %v594 = vpop.f32.mrf.mxu0
        %v595 = vadd.f32 0.0, %v594
        %596 = vdwg.mxu0
        %597 = vmatpush.msra.mxu0 0.0
        %598 = vmatpush.msra.mxu0 0.0
        %599 = vmatpush.msra.mxu0 0.0
        %600 = vmatpush.msra.mxu0 0.0
        %601 = vmatpush.msra.mxu0 0.0
        %602 = vmatpush.msra.mxu0 0.0
        %603 = vmatpush.msra.mxu0 0.0
        %604 = vmatpush.msra.mxu0 0.0
        %605 = vmatpush.msra.mxu0 0.0
        %606 = vmatpush.msra.mxu0 0.0
        %607 = vmatpush.msra.mxu0 0.0
        %608 = vmatpush.msra.mxu0 0.0
        %609 = vmatpush.msra.mxu0 0.0
        %610 = vmatpush.msra.mxu0 0.0
        %611 = vmatpush.msra.mxu0 %v517
        %612 = vmatpush.msra.mxu0 %v513
        %613 = vmatmul.f32.gmra.mxu0 %v524
        %v614 = vpop.f32.mrf.mxu0
        %v615 = vadd.f32 0.0, %v614
        %616 = vmatmul.f32.gmra.mxu0 %v526
        %v617 = vpop.f32.mrf.mxu0
        %v618 = vadd.f32 0.0, %v617
        %619 = vdwg.mxu0
        %v620 = vadd.f32 %v435, %v546
        %v621 = vadd.f32 %v458, %v569
        %v622 = vadd.f32 %v481, %v592
        %v623 = vadd.f32 %v504, %v615
        %v624 = vadd.f32 %v438, %v549
        %v625 = vadd.f32 %v461, %v572
        %v626 = vadd.f32 %v484, %v595
        %v627 = vadd.f32 %v507, %v618
        %s628 = scalar_lea.vmem %s1, 192
        %v629 = vld [vmem:[%s628] sm:$0xff]
        %v630 = vld [vmem:[%s628 + $0x8] sm:$0xff]
        %v631 = vld [vmem:[%s628 + $0x10] sm:$0xff]
        %v632 = vld [vmem:[%s628 + $0x18] sm:$0xff]
        %v633 = vld [vmem:[%s628 + $0x20] sm:$0xff]
        %v634 = vld [vmem:[%s628 + $0x28] sm:$0xff]
        %v635 = vld [vmem:[%s628 + $0x30] sm:$0xff]
        %v636 = vld [vmem:[%s628 + $0x38] sm:$0xff]
        %vm637 = vcmask 1044480
        %v638 = vrot.slane %v289, 3
        %v639 = vrot.slane %v286, 3
        %v640 = vsel %vm637, %v638, %v639
        %v641 = vrot.slane %v290, 3
        %v642 = vsel %vm637, %v639, %v641
        %v643 = vsel %vm316, %v640, 0
        %v645 = vsel %vm316, %v642, 0
        %647 = vmatpush.msra.mxu0 0.0
        %648 = vmatpush.msra.mxu0 0.0
        %649 = vmatpush.msra.mxu0 0.0
        %650 = vmatpush.msra.mxu0 0.0
        %651 = vmatpush.msra.mxu0 0.0
        %652 = vmatpush.msra.mxu0 0.0
        %653 = vmatpush.msra.mxu0 0.0
        %654 = vmatpush.msra.mxu0 0.0
        %655 = vmatpush.msra.mxu0 0.0
        %656 = vmatpush.msra.mxu0 0.0
        %657 = vmatpush.msra.mxu0 0.0
        %658 = vmatpush.msra.mxu0 0.0
        %659 = vmatpush.msra.mxu0 0.0
        %660 = vmatpush.msra.mxu0 0.0
        %661 = vmatpush.msra.mxu0 %v633
        %662 = vmatpush.msra.mxu0 %v629
        %663 = vmatmul.f32.gmra.mxu0 %v643
        %v664 = vpop.f32.mrf.mxu0
        %v665 = vadd.f32 0.0, %v664
        %666 = vmatmul.f32.gmra.mxu0 %v645
        %v667 = vpop.f32.mrf.mxu0
        %v668 = vadd.f32 0.0, %v667
        %669 = vdwg.mxu0
        %670 = vmatpush.msra.mxu0 0.0
        %671 = vmatpush.msra.mxu0 0.0
        %672 = vmatpush.msra.mxu0 0.0
        %673 = vmatpush.msra.mxu0 0.0
        %674 = vmatpush.msra.mxu0 0.0
        %675 = vmatpush.msra.mxu0 0.0
        %676 = vmatpush.msra.mxu0 0.0
        %677 = vmatpush.msra.mxu0 0.0
        %678 = vmatpush.msra.mxu0 0.0
        %679 = vmatpush.msra.mxu0 0.0
        %680 = vmatpush.msra.mxu0 0.0
        %681 = vmatpush.msra.mxu0 0.0
        %682 = vmatpush.msra.mxu0 0.0
        %683 = vmatpush.msra.mxu0 0.0
        %684 = vmatpush.msra.mxu0 %v634
        %685 = vmatpush.msra.mxu0 %v630
        %686 = vmatmul.f32.gmra.mxu0 %v643
        %v687 = vpop.f32.mrf.mxu0
        %v688 = vadd.f32 0.0, %v687
        %689 = vmatmul.f32.gmra.mxu0 %v645
        %v690 = vpop.f32.mrf.mxu0
        %v691 = vadd.f32 0.0, %v690
        %692 = vdwg.mxu0
        %693 = vmatpush.msra.mxu0 0.0
        %694 = vmatpush.msra.mxu0 0.0
        %695 = vmatpush.msra.mxu0 0.0
        %696 = vmatpush.msra.mxu0 0.0
        %697 = vmatpush.msra.mxu0 0.0
        %698 = vmatpush.msra.mxu0 0.0
        %699 = vmatpush.msra.mxu0 0.0
        %700 = vmatpush.msra.mxu0 0.0
        %701 = vmatpush.msra.mxu0 0.0
        %702 = vmatpush.msra.mxu0 0.0
        %703 = vmatpush.msra.mxu0 0.0
        %704 = vmatpush.msra.mxu0 0.0
        %705 = vmatpush.msra.mxu0 0.0
        %706 = vmatpush.msra.mxu0 0.0
        %707 = vmatpush.msra.mxu0 %v635
        %708 = vmatpush.msra.mxu0 %v631
        %709 = vmatmul.f32.gmra.mxu0 %v643
        %v710 = vpop.f32.mrf.mxu0
        %v711 = vadd.f32 0.0, %v710
        %712 = vmatmul.f32.gmra.mxu0 %v645
        %v713 = vpop.f32.mrf.mxu0
        %v714 = vadd.f32 0.0, %v713
        %715 = vdwg.mxu0
        %716 = vmatpush.msra.mxu0 0.0
        %717 = vmatpush.msra.mxu0 0.0
        %718 = vmatpush.msra.mxu0 0.0
        %719 = vmatpush.msra.mxu0 0.0
        %720 = vmatpush.msra.mxu0 0.0
        %721 = vmatpush.msra.mxu0 0.0
        %722 = vmatpush.msra.mxu0 0.0
        %723 = vmatpush.msra.mxu0 0.0
        %724 = vmatpush.msra.mxu0 0.0
        %725 = vmatpush.msra.mxu0 0.0
        %726 = vmatpush.msra.mxu0 0.0
        %727 = vmatpush.msra.mxu0 0.0
        %728 = vmatpush.msra.mxu0 0.0
        %729 = vmatpush.msra.mxu0 0.0
        %730 = vmatpush.msra.mxu0 %v636
        %731 = vmatpush.msra.mxu0 %v632
        %732 = vmatmul.f32.gmra.mxu0 %v643
        %v733 = vpop.f32.mrf.mxu0
        %v734 = vadd.f32 0.0, %v733
        %735 = vmatmul.f32.gmra.mxu0 %v645
        %v736 = vpop.f32.mrf.mxu0
        %v737 = vadd.f32 0.0, %v736
        %738 = vdwg.mxu0
        %v739 = vadd.f32 %v620, %v665
        %v740 = vadd.f32 %v621, %v688
        %v741 = vadd.f32 %v622, %v711
        %v742 = vadd.f32 %v623, %v734
        %v743 = vadd.f32 %v624, %v668
        %v744 = vadd.f32 %v625, %v691
        %v745 = vadd.f32 %v626, %v714
        %v746 = vadd.f32 %v627, %v737
        %s747 = scalar_lea.vmem %s1, 256
        %v748 = vld [vmem:[%s747] sm:$0xff]
        %v749 = vld [vmem:[%s747 + $0x8] sm:$0xff]
        %v750 = vld [vmem:[%s747 + $0x10] sm:$0xff]
        %v751 = vld [vmem:[%s747 + $0x18] sm:$0xff]
        %v752 = vld [vmem:[%s747 + $0x20] sm:$0xff]
        %v753 = vld [vmem:[%s747 + $0x28] sm:$0xff]
        %v754 = vld [vmem:[%s747 + $0x30] sm:$0xff]
        %v755 = vld [vmem:[%s747 + $0x38] sm:$0xff]
        %v756 = vrot.slane %v289, 4
        %v757 = vrot.slane %v286, 4
        %v758 = vsel %vm283, %v756, %v757
        %v759 = vrot.slane %v290, 4
        %v760 = vsel %vm283, %v757, %v759
        %v761 = vsel %vm316, %v758, 0
        %v763 = vsel %vm316, %v760, 0
        %765 = vmatpush.msra.mxu0 0.0
        %766 = vmatpush.msra.mxu0 0.0
        %767 = vmatpush.msra.mxu0 0.0
        %768 = vmatpush.msra.mxu0 0.0
        %769 = vmatpush.msra.mxu0 0.0
        %770 = vmatpush.msra.mxu0 0.0
        %771 = vmatpush.msra.mxu0 0.0
        %772 = vmatpush.msra.mxu0 0.0
        %773 = vmatpush.msra.mxu0 0.0
        %774 = vmatpush.msra.mxu0 0.0
        %775 = vmatpush.msra.mxu0 0.0
        %776 = vmatpush.msra.mxu0 0.0
        %777 = vmatpush.msra.mxu0 0.0
        %778 = vmatpush.msra.mxu0 0.0
        %779 = vmatpush.msra.mxu0 %v752
        %780 = vmatpush.msra.mxu0 %v748
        %781 = vmatmul.f32.gmra.mxu0 %v761
        %v782 = vpop.f32.mrf.mxu0
        %v783 = vadd.f32 0.0, %v782
        %784 = vmatmul.f32.gmra.mxu0 %v763
        %v785 = vpop.f32.mrf.mxu0
        %v786 = vadd.f32 0.0, %v785
        %787 = vdwg.mxu0
        %788 = vmatpush.msra.mxu0 0.0
        %789 = vmatpush.msra.mxu0 0.0
        %790 = vmatpush.msra.mxu0 0.0
        %791 = vmatpush.msra.mxu0 0.0
        %792 = vmatpush.msra.mxu0 0.0
        %793 = vmatpush.msra.mxu0 0.0
        %794 = vmatpush.msra.mxu0 0.0
        %795 = vmatpush.msra.mxu0 0.0
        %796 = vmatpush.msra.mxu0 0.0
        %797 = vmatpush.msra.mxu0 0.0
        %798 = vmatpush.msra.mxu0 0.0
        %799 = vmatpush.msra.mxu0 0.0
        %800 = vmatpush.msra.mxu0 0.0
        %801 = vmatpush.msra.mxu0 0.0
        %802 = vmatpush.msra.mxu0 %v753
        %803 = vmatpush.msra.mxu0 %v749
        %804 = vmatmul.f32.gmra.mxu0 %v761
        %v805 = vpop.f32.mrf.mxu0
        %v806 = vadd.f32 0.0, %v805
        %807 = vmatmul.f32.gmra.mxu0 %v763
        %v808 = vpop.f32.mrf.mxu0
        %v809 = vadd.f32 0.0, %v808
        %810 = vdwg.mxu0
        %811 = vmatpush.msra.mxu0 0.0
        %812 = vmatpush.msra.mxu0 0.0
        %813 = vmatpush.msra.mxu0 0.0
        %814 = vmatpush.msra.mxu0 0.0
        %815 = vmatpush.msra.mxu0 0.0
        %816 = vmatpush.msra.mxu0 0.0
        %817 = vmatpush.msra.mxu0 0.0
        %818 = vmatpush.msra.mxu0 0.0
        %819 = vmatpush.msra.mxu0 0.0
        %820 = vmatpush.msra.mxu0 0.0
        %821 = vmatpush.msra.mxu0 0.0
        %822 = vmatpush.msra.mxu0 0.0
        %823 = vmatpush.msra.mxu0 0.0
        %824 = vmatpush.msra.mxu0 0.0
        %825 = vmatpush.msra.mxu0 %v754
        %826 = vmatpush.msra.mxu0 %v750
        %827 = vmatmul.f32.gmra.mxu0 %v761
        %v828 = vpop.f32.mrf.mxu0
        %v829 = vadd.f32 0.0, %v828
        %830 = vmatmul.f32.gmra.mxu0 %v763
        %v831 = vpop.f32.mrf.mxu0
        %v832 = vadd.f32 0.0, %v831
        %833 = vdwg.mxu0
        %834 = vmatpush.msra.mxu0 0.0
        %835 = vmatpush.msra.mxu0 0.0
        %836 = vmatpush.msra.mxu0 0.0
        %837 = vmatpush.msra.mxu0 0.0
        %838 = vmatpush.msra.mxu0 0.0
        %839 = vmatpush.msra.mxu0 0.0
        %840 = vmatpush.msra.mxu0 0.0
        %841 = vmatpush.msra.mxu0 0.0
        %842 = vmatpush.msra.mxu0 0.0
        %843 = vmatpush.msra.mxu0 0.0
        %844 = vmatpush.msra.mxu0 0.0
        %845 = vmatpush.msra.mxu0 0.0
        %846 = vmatpush.msra.mxu0 0.0
        %847 = vmatpush.msra.mxu0 0.0
        %848 = vmatpush.msra.mxu0 %v755
        %849 = vmatpush.msra.mxu0 %v751
        %850 = vmatmul.f32.gmra.mxu0 %v761
        %v851 = vpop.f32.mrf.mxu0
        %v852 = vadd.f32 0.0, %v851
        %853 = vmatmul.f32.gmra.mxu0 %v763
        %v854 = vpop.f32.mrf.mxu0
        %v855 = vadd.f32 0.0, %v854
        %856 = vdwg.mxu0
        %v857 = vadd.f32 %v739, %v783
        %v858 = vadd.f32 %v740, %v806
        %v859 = vadd.f32 %v741, %v829
        %v860 = vadd.f32 %v742, %v852
        %v861 = vadd.f32 %v743, %v786
        %v862 = vadd.f32 %v744, %v809
        %v863 = vadd.f32 %v745, %v832
        %v864 = vadd.f32 %v746, %v855
        %s865 = scalar_lea.vmem %s1, 320
        %v866 = vld [vmem:[%s865] sm:$0xff]
        %v867 = vld [vmem:[%s865 + $0x8] sm:$0xff]
        %v868 = vld [vmem:[%s865 + $0x10] sm:$0xff]
        %v869 = vld [vmem:[%s865 + $0x18] sm:$0xff]
        %v870 = vld [vmem:[%s865 + $0x20] sm:$0xff]
        %v871 = vld [vmem:[%s865 + $0x28] sm:$0xff]
        %v872 = vld [vmem:[%s865 + $0x30] sm:$0xff]
        %v873 = vld [vmem:[%s865 + $0x38] sm:$0xff]
        %vm874 = vcmask 1042432
        %v875 = vrot.slane %v289, 5
        %v876 = vrot.slane %v286, 5
        %v877 = vsel %vm874, %v875, %v876
        %v878 = vrot.slane %v290, 5
        %v879 = vsel %vm874, %v876, %v878
        %v880 = vsel %vm316, %v877, 0
        %v882 = vsel %vm316, %v879, 0
        %884 = vmatpush.msra.mxu0 0.0
        %885 = vmatpush.msra.mxu0 0.0
        %886 = vmatpush.msra.mxu0 0.0
        %887 = vmatpush.msra.mxu0 0.0
        %888 = vmatpush.msra.mxu0 0.0
        %889 = vmatpush.msra.mxu0 0.0
        %890 = vmatpush.msra.mxu0 0.0
        %891 = vmatpush.msra.mxu0 0.0
        %892 = vmatpush.msra.mxu0 0.0
        %893 = vmatpush.msra.mxu0 0.0
        %894 = vmatpush.msra.mxu0 0.0
        %895 = vmatpush.msra.mxu0 0.0
        %896 = vmatpush.msra.mxu0 0.0
        %897 = vmatpush.msra.mxu0 0.0
        %898 = vmatpush.msra.mxu0 %v870
        %899 = vmatpush.msra.mxu0 %v866
        %900 = vmatmul.f32.gmra.mxu0 %v880
        %v901 = vpop.f32.mrf.mxu0
        %v902 = vadd.f32 0.0, %v901
        %903 = vmatmul.f32.gmra.mxu0 %v882
        %v904 = vpop.f32.mrf.mxu0
        %v905 = vadd.f32 0.0, %v904
        %906 = vdwg.mxu0
        %907 = vmatpush.msra.mxu0 0.0
        %908 = vmatpush.msra.mxu0 0.0
        %909 = vmatpush.msra.mxu0 0.0
        %910 = vmatpush.msra.mxu0 0.0
        %911 = vmatpush.msra.mxu0 0.0
        %912 = vmatpush.msra.mxu0 0.0
        %913 = vmatpush.msra.mxu0 0.0
        %914 = vmatpush.msra.mxu0 0.0
        %915 = vmatpush.msra.mxu0 0.0
        %916 = vmatpush.msra.mxu0 0.0
        %917 = vmatpush.msra.mxu0 0.0
        %918 = vmatpush.msra.mxu0 0.0
        %919 = vmatpush.msra.mxu0 0.0
        %920 = vmatpush.msra.mxu0 0.0
        %921 = vmatpush.msra.mxu0 %v871
        %922 = vmatpush.msra.mxu0 %v867
        %923 = vmatmul.f32.gmra.mxu0 %v880
        %v924 = vpop.f32.mrf.mxu0
        %v925 = vadd.f32 0.0, %v924
        %926 = vmatmul.f32.gmra.mxu0 %v882
        %v927 = vpop.f32.mrf.mxu0
        %v928 = vadd.f32 0.0, %v927
        %929 = vdwg.mxu0
        %930 = vmatpush.msra.mxu0 0.0
        %931 = vmatpush.msra.mxu0 0.0
        %932 = vmatpush.msra.mxu0 0.0
        %933 = vmatpush.msra.mxu0 0.0
        %934 = vmatpush.msra.mxu0 0.0
        %935 = vmatpush.msra.mxu0 0.0
        %936 = vmatpush.msra.mxu0 0.0
        %937 = vmatpush.msra.mxu0 0.0
        %938 = vmatpush.msra.mxu0 0.0
        %939 = vmatpush.msra.mxu0 0.0
        %940 = vmatpush.msra.mxu0 0.0
        %941 = vmatpush.msra.mxu0 0.0
        %942 = vmatpush.msra.mxu0 0.0
        %943 = vmatpush.msra.mxu0 0.0
        %944 = vmatpush.msra.mxu0 %v872
        %945 = vmatpush.msra.mxu0 %v868
        %946 = vmatmul.f32.gmra.mxu0 %v880
        %v947 = vpop.f32.mrf.mxu0
        %v948 = vadd.f32 0.0, %v947
        %949 = vmatmul.f32.gmra.mxu0 %v882
        %v950 = vpop.f32.mrf.mxu0
        %v951 = vadd.f32 0.0, %v950
        %952 = vdwg.mxu0
        %953 = vmatpush.msra.mxu0 0.0
        %954 = vmatpush.msra.mxu0 0.0
        %955 = vmatpush.msra.mxu0 0.0
        %956 = vmatpush.msra.mxu0 0.0
        %957 = vmatpush.msra.mxu0 0.0
        %958 = vmatpush.msra.mxu0 0.0
        %959 = vmatpush.msra.mxu0 0.0
        %960 = vmatpush.msra.mxu0 0.0
        %961 = vmatpush.msra.mxu0 0.0
        %962 = vmatpush.msra.mxu0 0.0
        %963 = vmatpush.msra.mxu0 0.0
        %964 = vmatpush.msra.mxu0 0.0
        %965 = vmatpush.msra.mxu0 0.0
        %966 = vmatpush.msra.mxu0 0.0
        %967 = vmatpush.msra.mxu0 %v873
        %968 = vmatpush.msra.mxu0 %v869
        %969 = vmatmul.f32.gmra.mxu0 %v880
        %v970 = vpop.f32.mrf.mxu0
        %v971 = vadd.f32 0.0, %v970
        %972 = vmatmul.f32.gmra.mxu0 %v882
        %v973 = vpop.f32.mrf.mxu0
        %v974 = vadd.f32 0.0, %v973
        %975 = vdwg.mxu0
        %v976 = vadd.f32 %v857, %v902
        %v977 = vadd.f32 %v858, %v925
        %v978 = vadd.f32 %v859, %v948
        %v979 = vadd.f32 %v860, %v971
        %v980 = vadd.f32 %v861, %v905
        %v981 = vadd.f32 %v862, %v928
        %v982 = vadd.f32 %v863, %v951
        %v983 = vadd.f32 %v864, %v974
        %s984 = scalar_lea.vmem %s1, 384
        %v985 = vld [vmem:[%s984] sm:$0xff]
        %v986 = vld [vmem:[%s984 + $0x8] sm:$0xff]
        %v987 = vld [vmem:[%s984 + $0x10] sm:$0xff]
        %v988 = vld [vmem:[%s984 + $0x18] sm:$0xff]
        %v989 = vld [vmem:[%s984 + $0x20] sm:$0xff]
        %v990 = vld [vmem:[%s984 + $0x28] sm:$0xff]
        %v991 = vld [vmem:[%s984 + $0x30] sm:$0xff]
        %v992 = vld [vmem:[%s984 + $0x38] sm:$0xff]
        %vm993 = vcmask 1041408
        %v994 = vrot.slane %v289, 6
        %v995 = vrot.slane %v286, 6
        %v996 = vsel %vm993, %v994, %v995
        %v997 = vrot.slane %v290, 6
        %v998 = vsel %vm993, %v995, %v997
        %v999 = vsel %vm316, %v996, 0
        %v1001 = vsel %vm316, %v998, 0
        %1003 = vmatpush.msra.mxu0 0.0
        %1004 = vmatpush.msra.mxu0 0.0
        %1005 = vmatpush.msra.mxu0 0.0
        %1006 = vmatpush.msra.mxu0 0.0
        %1007 = vmatpush.msra.mxu0 0.0
        %1008 = vmatpush.msra.mxu0 0.0
        %1009 = vmatpush.msra.mxu0 0.0
        %1010 = vmatpush.msra.mxu0 0.0
        %1011 = vmatpush.msra.mxu0 0.0
        %1012 = vmatpush.msra.mxu0 0.0
        %1013 = vmatpush.msra.mxu0 0.0
        %1014 = vmatpush.msra.mxu0 0.0
        %1015 = vmatpush.msra.mxu0 0.0
        %1016 = vmatpush.msra.mxu0 0.0
        %1017 = vmatpush.msra.mxu0 %v989
        %1018 = vmatpush.msra.mxu0 %v985
        %1019 = vmatmul.f32.gmra.mxu0 %v999
        %v1020 = vpop.f32.mrf.mxu0
        %v1021 = vadd.f32 0.0, %v1020
        %1022 = vmatmul.f32.gmra.mxu0 %v1001
        %v1023 = vpop.f32.mrf.mxu0
        %v1024 = vadd.f32 0.0, %v1023
        %1025 = vdwg.mxu0
        %1026 = vmatpush.msra.mxu0 0.0
        %1027 = vmatpush.msra.mxu0 0.0
        %1028 = vmatpush.msra.mxu0 0.0
        %1029 = vmatpush.msra.mxu0 0.0
        %1030 = vmatpush.msra.mxu0 0.0
        %1031 = vmatpush.msra.mxu0 0.0
        %1032 = vmatpush.msra.mxu0 0.0
        %1033 = vmatpush.msra.mxu0 0.0
        %1034 = vmatpush.msra.mxu0 0.0
        %1035 = vmatpush.msra.mxu0 0.0
        %1036 = vmatpush.msra.mxu0 0.0
        %1037 = vmatpush.msra.mxu0 0.0
        %1038 = vmatpush.msra.mxu0 0.0
        %1039 = vmatpush.msra.mxu0 0.0
        %1040 = vmatpush.msra.mxu0 %v990
        %1041 = vmatpush.msra.mxu0 %v986
        %1042 = vmatmul.f32.gmra.mxu0 %v999
        %v1043 = vpop.f32.mrf.mxu0
        %v1044 = vadd.f32 0.0, %v1043
        %1045 = vmatmul.f32.gmra.mxu0 %v1001
        %v1046 = vpop.f32.mrf.mxu0
        %v1047 = vadd.f32 0.0, %v1046
        %1048 = vdwg.mxu0
        %1049 = vmatpush.msra.mxu0 0.0
        %1050 = vmatpush.msra.mxu0 0.0
        %1051 = vmatpush.msra.mxu0 0.0
        %1052 = vmatpush.msra.mxu0 0.0
        %1053 = vmatpush.msra.mxu0 0.0
        %1054 = vmatpush.msra.mxu0 0.0
        %1055 = vmatpush.msra.mxu0 0.0
        %1056 = vmatpush.msra.mxu0 0.0
        %1057 = vmatpush.msra.mxu0 0.0
        %1058 = vmatpush.msra.mxu0 0.0
        %1059 = vmatpush.msra.mxu0 0.0
        %1060 = vmatpush.msra.mxu0 0.0
        %1061 = vmatpush.msra.mxu0 0.0
        %1062 = vmatpush.msra.mxu0 0.0
        %1063 = vmatpush.msra.mxu0 %v991
        %1064 = vmatpush.msra.mxu0 %v987
        %1065 = vmatmul.f32.gmra.mxu0 %v999
        %v1066 = vpop.f32.mrf.mxu0
        %v1067 = vadd.f32 0.0, %v1066
        %1068 = vmatmul.f32.gmra.mxu0 %v1001
        %v1069 = vpop.f32.mrf.mxu0
        %v1070 = vadd.f32 0.0, %v1069
        %1071 = vdwg.mxu0
        %1072 = vmatpush.msra.mxu0 0.0
        %1073 = vmatpush.msra.mxu0 0.0
        %1074 = vmatpush.msra.mxu0 0.0
        %1075 = vmatpush.msra.mxu0 0.0
        %1076 = vmatpush.msra.mxu0 0.0
        %1077 = vmatpush.msra.mxu0 0.0
        %1078 = vmatpush.msra.mxu0 0.0
        %1079 = vmatpush.msra.mxu0 0.0
        %1080 = vmatpush.msra.mxu0 0.0
        %1081 = vmatpush.msra.mxu0 0.0
        %1082 = vmatpush.msra.mxu0 0.0
        %1083 = vmatpush.msra.mxu0 0.0
        %1084 = vmatpush.msra.mxu0 0.0
        %1085 = vmatpush.msra.mxu0 0.0
        %1086 = vmatpush.msra.mxu0 %v992
        %1087 = vmatpush.msra.mxu0 %v988
        %1088 = vmatmul.f32.gmra.mxu0 %v999
        %v1089 = vpop.f32.mrf.mxu0
        %v1090 = vadd.f32 0.0, %v1089
        %1091 = vmatmul.f32.gmra.mxu0 %v1001
        %v1092 = vpop.f32.mrf.mxu0
        %v1093 = vadd.f32 0.0, %v1092
        %1094 = vdwg.mxu0
        %v1095 = vadd.f32 %v976, %v1021
        %v1096 = vadd.f32 %v977, %v1044
        %v1097 = vadd.f32 %v978, %v1067
        %v1098 = vadd.f32 %v979, %v1090
        %v1099 = vadd.f32 %v980, %v1024
        %v1100 = vadd.f32 %v981, %v1047
        %v1101 = vadd.f32 %v982, %v1070
        %v1102 = vadd.f32 %v983, %v1093
        %s1103 = scalar_lea.vmem %s1, 448
        %v1104 = vld [vmem:[%s1103] sm:$0xff]
        %v1105 = vld [vmem:[%s1103 + $0x8] sm:$0xff]
        %v1106 = vld [vmem:[%s1103 + $0x10] sm:$0xff]
        %v1107 = vld [vmem:[%s1103 + $0x18] sm:$0xff]
        %v1108 = vld [vmem:[%s1103 + $0x20] sm:$0xff]
        %v1109 = vld [vmem:[%s1103 + $0x28] sm:$0xff]
        %v1110 = vld [vmem:[%s1103 + $0x30] sm:$0xff]
        %v1111 = vld [vmem:[%s1103 + $0x38] sm:$0xff]
        %vm1112 = vcmask 1040384
        %v1113 = vrot.slane %v289, 7
        %v1114 = vrot.slane %v286, 7
        %v1115 = vsel %vm1112, %v1113, %v1114
        %v1116 = vrot.slane %v290, 7
        %v1117 = vsel %vm1112, %v1114, %v1116
        %v1118 = vsel %vm316, %v1115, 0
        %v1120 = vsel %vm316, %v1117, 0
        %1122 = vmatpush.msra.mxu0 0.0
        %1123 = vmatpush.msra.mxu0 0.0
        %1124 = vmatpush.msra.mxu0 0.0
        %1125 = vmatpush.msra.mxu0 0.0
        %1126 = vmatpush.msra.mxu0 0.0
        %1127 = vmatpush.msra.mxu0 0.0
        %1128 = vmatpush.msra.mxu0 0.0
        %1129 = vmatpush.msra.mxu0 0.0
        %1130 = vmatpush.msra.mxu0 0.0
        %1131 = vmatpush.msra.mxu0 0.0
        %1132 = vmatpush.msra.mxu0 0.0
        %1133 = vmatpush.msra.mxu0 0.0
        %1134 = vmatpush.msra.mxu0 0.0
        %1135 = vmatpush.msra.mxu0 0.0
        %1136 = vmatpush.msra.mxu0 %v1108
        %1137 = vmatpush.msra.mxu0 %v1104
        %1138 = vmatmul.f32.gmra.mxu0 %v1118
        %v1139 = vpop.f32.mrf.mxu0
        %v1140 = vadd.f32 0.0, %v1139
        %1141 = vmatmul.f32.gmra.mxu0 %v1120
        %v1142 = vpop.f32.mrf.mxu0
        %v1143 = vadd.f32 0.0, %v1142
        %1144 = vdwg.mxu0
        %1145 = vmatpush.msra.mxu0 0.0
        %1146 = vmatpush.msra.mxu0 0.0
        %1147 = vmatpush.msra.mxu0 0.0
        %1148 = vmatpush.msra.mxu0 0.0
        %1149 = vmatpush.msra.mxu0 0.0
        %1150 = vmatpush.msra.mxu0 0.0
        %1151 = vmatpush.msra.mxu0 0.0
        %1152 = vmatpush.msra.mxu0 0.0
        %1153 = vmatpush.msra.mxu0 0.0
        %1154 = vmatpush.msra.mxu0 0.0
        %1155 = vmatpush.msra.mxu0 0.0
        %1156 = vmatpush.msra.mxu0 0.0
        %1157 = vmatpush.msra.mxu0 0.0
        %1158 = vmatpush.msra.mxu0 0.0
        %1159 = vmatpush.msra.mxu0 %v1109
        %1160 = vmatpush.msra.mxu0 %v1105
        %1161 = vmatmul.f32.gmra.mxu0 %v1118
        %v1162 = vpop.f32.mrf.mxu0
        %v1163 = vadd.f32 0.0, %v1162
        %1164 = vmatmul.f32.gmra.mxu0 %v1120
        %v1165 = vpop.f32.mrf.mxu0
        %v1166 = vadd.f32 0.0, %v1165
        %1167 = vdwg.mxu0
        %1168 = vmatpush.msra.mxu0 0.0
        %1169 = vmatpush.msra.mxu0 0.0
        %1170 = vmatpush.msra.mxu0 0.0
        %1171 = vmatpush.msra.mxu0 0.0
        %1172 = vmatpush.msra.mxu0 0.0
        %1173 = vmatpush.msra.mxu0 0.0
        %1174 = vmatpush.msra.mxu0 0.0
        %1175 = vmatpush.msra.mxu0 0.0
        %1176 = vmatpush.msra.mxu0 0.0
        %1177 = vmatpush.msra.mxu0 0.0
        %1178 = vmatpush.msra.mxu0 0.0
        %1179 = vmatpush.msra.mxu0 0.0
        %1180 = vmatpush.msra.mxu0 0.0
        %1181 = vmatpush.msra.mxu0 0.0
        %1182 = vmatpush.msra.mxu0 %v1110
        %1183 = vmatpush.msra.mxu0 %v1106
        %1184 = vmatmul.f32.gmra.mxu0 %v1118
        %v1185 = vpop.f32.mrf.mxu0
        %v1186 = vadd.f32 0.0, %v1185
        %1187 = vmatmul.f32.gmra.mxu0 %v1120
        %v1188 = vpop.f32.mrf.mxu0
        %v1189 = vadd.f32 0.0, %v1188
        %1190 = vdwg.mxu0
        %1191 = vmatpush.msra.mxu0 0.0
        %1192 = vmatpush.msra.mxu0 0.0
        %1193 = vmatpush.msra.mxu0 0.0
        %1194 = vmatpush.msra.mxu0 0.0
        %1195 = vmatpush.msra.mxu0 0.0
        %1196 = vmatpush.msra.mxu0 0.0
        %1197 = vmatpush.msra.mxu0 0.0
        %1198 = vmatpush.msra.mxu0 0.0
        %1199 = vmatpush.msra.mxu0 0.0
        %1200 = vmatpush.msra.mxu0 0.0
        %1201 = vmatpush.msra.mxu0 0.0
        %1202 = vmatpush.msra.mxu0 0.0
        %1203 = vmatpush.msra.mxu0 0.0
        %1204 = vmatpush.msra.mxu0 0.0
        %1205 = vmatpush.msra.mxu0 %v1111
        %1206 = vmatpush.msra.mxu0 %v1107
        %1207 = vmatmul.f32.gmra.mxu0 %v1118
        %v1208 = vpop.f32.mrf.mxu0
        %v1209 = vadd.f32 0.0, %v1208
        %1210 = vmatmul.f32.gmra.mxu0 %v1120
        %v1211 = vpop.f32.mrf.mxu0
        %v1212 = vadd.f32 0.0, %v1211
        %1213 = vdwg.mxu0
        %v1214 = vadd.f32 %v1095, %v1140
        %v1215 = vadd.f32 %v1096, %v1163
        %v1216 = vadd.f32 %v1097, %v1186
        %v1217 = vadd.f32 %v1098, %v1209
        %v1218 = vadd.f32 %v1099, %v1143
        %v1219 = vadd.f32 %v1100, %v1166
        %v1220 = vadd.f32 %v1101, %v1189
        %v1221 = vadd.f32 %v1102, %v1212
        %s1222 = scalar_lea.vmem %s1, 512
        %v1223 = vld [vmem:[%s1222] sm:$0xff]
        %v1224 = vld [vmem:[%s1222 + $0x8] sm:$0xff]
        %v1225 = vld [vmem:[%s1222 + $0x10] sm:$0xff]
        %v1226 = vld [vmem:[%s1222 + $0x18] sm:$0xff]
        %v1227 = vld [vmem:[%s1222 + $0x20] sm:$0xff]
        %v1228 = vld [vmem:[%s1222 + $0x28] sm:$0xff]
        %v1229 = vld [vmem:[%s1222 + $0x30] sm:$0xff]
        %v1230 = vld [vmem:[%s1222 + $0x38] sm:$0xff]
        %v1231 = vsel %vm316, %v290, 0
        %1233 = vmatpush.msra.mxu0 0.0
        %1234 = vmatpush.msra.mxu0 0.0
        %1235 = vmatpush.msra.mxu0 0.0
        %1236 = vmatpush.msra.mxu0 0.0
        %1237 = vmatpush.msra.mxu0 0.0
        %1238 = vmatpush.msra.mxu0 0.0
        %1239 = vmatpush.msra.mxu0 0.0
        %1240 = vmatpush.msra.mxu0 0.0
        %1241 = vmatpush.msra.mxu0 0.0
        %1242 = vmatpush.msra.mxu0 0.0
        %1243 = vmatpush.msra.mxu0 0.0
        %1244 = vmatpush.msra.mxu0 0.0
        %1245 = vmatpush.msra.mxu0 0.0
        %1246 = vmatpush.msra.mxu0 0.0
        %1247 = vmatpush.msra.mxu0 %v1227
        %1248 = vmatpush.msra.mxu0 %v1223
        %1249 = vmatmul.f32.gmra.mxu0 %v415
        %v1250 = vpop.f32.mrf.mxu0
        %v1251 = vadd.f32 0.0, %v1250
        %1252 = vmatmul.f32.gmra.mxu0 %v1231
        %v1253 = vpop.f32.mrf.mxu0
        %v1254 = vadd.f32 0.0, %v1253
        %1255 = vdwg.mxu0
        %1256 = vmatpush.msra.mxu0 0.0
        %1257 = vmatpush.msra.mxu0 0.0
        %1258 = vmatpush.msra.mxu0 0.0
        %1259 = vmatpush.msra.mxu0 0.0
        %1260 = vmatpush.msra.mxu0 0.0
        %1261 = vmatpush.msra.mxu0 0.0
        %1262 = vmatpush.msra.mxu0 0.0
        %1263 = vmatpush.msra.mxu0 0.0
        %1264 = vmatpush.msra.mxu0 0.0
        %1265 = vmatpush.msra.mxu0 0.0
        %1266 = vmatpush.msra.mxu0 0.0
        %1267 = vmatpush.msra.mxu0 0.0
        %1268 = vmatpush.msra.mxu0 0.0
        %1269 = vmatpush.msra.mxu0 0.0
        %1270 = vmatpush.msra.mxu0 %v1228
        %1271 = vmatpush.msra.mxu0 %v1224
        %1272 = vmatmul.f32.gmra.mxu0 %v415
        %v1273 = vpop.f32.mrf.mxu0
        %v1274 = vadd.f32 0.0, %v1273
        %1275 = vmatmul.f32.gmra.mxu0 %v1231
        %v1276 = vpop.f32.mrf.mxu0
        %v1277 = vadd.f32 0.0, %v1276
        %1278 = vdwg.mxu0
        %1279 = vmatpush.msra.mxu0 0.0
        %1280 = vmatpush.msra.mxu0 0.0
        %1281 = vmatpush.msra.mxu0 0.0
        %1282 = vmatpush.msra.mxu0 0.0
        %1283 = vmatpush.msra.mxu0 0.0
        %1284 = vmatpush.msra.mxu0 0.0
        %1285 = vmatpush.msra.mxu0 0.0
        %1286 = vmatpush.msra.mxu0 0.0
        %1287 = vmatpush.msra.mxu0 0.0
        %1288 = vmatpush.msra.mxu0 0.0
        %1289 = vmatpush.msra.mxu0 0.0
        %1290 = vmatpush.msra.mxu0 0.0
        %1291 = vmatpush.msra.mxu0 0.0
        %1292 = vmatpush.msra.mxu0 0.0
        %1293 = vmatpush.msra.mxu0 %v1229
        %1294 = vmatpush.msra.mxu0 %v1225
        %1295 = vmatmul.f32.gmra.mxu0 %v415
        %v1296 = vpop.f32.mrf.mxu0
        %v1297 = vadd.f32 0.0, %v1296
        %1298 = vmatmul.f32.gmra.mxu0 %v1231
        %v1299 = vpop.f32.mrf.mxu0
        %v1300 = vadd.f32 0.0, %v1299
        %1301 = vdwg.mxu0
        %1302 = vmatpush.msra.mxu0 0.0
        %1303 = vmatpush.msra.mxu0 0.0
        %1304 = vmatpush.msra.mxu0 0.0
        %1305 = vmatpush.msra.mxu0 0.0
        %1306 = vmatpush.msra.mxu0 0.0
        %1307 = vmatpush.msra.mxu0 0.0
        %1308 = vmatpush.msra.mxu0 0.0
        %1309 = vmatpush.msra.mxu0 0.0
        %1310 = vmatpush.msra.mxu0 0.0
        %1311 = vmatpush.msra.mxu0 0.0
        %1312 = vmatpush.msra.mxu0 0.0
        %1313 = vmatpush.msra.mxu0 0.0
        %1314 = vmatpush.msra.mxu0 0.0
        %1315 = vmatpush.msra.mxu0 0.0
        %1316 = vmatpush.msra.mxu0 %v1230
        %1317 = vmatpush.msra.mxu0 %v1226
        %1318 = vmatmul.f32.gmra.mxu0 %v415
        %v1319 = vpop.f32.mrf.mxu0
        %v1320 = vadd.f32 0.0, %v1319
        %1321 = vmatmul.f32.gmra.mxu0 %v1231
        %v1322 = vpop.f32.mrf.mxu0
        %v1323 = vadd.f32 0.0, %v1322
        %1324 = vdwg.mxu0
        %v1325 = vadd.f32 %v1214, %v1251
        %v1326 = vadd.f32 %v1215, %v1274
        %v1327 = vadd.f32 %v1216, %v1297
        %v1328 = vadd.f32 %v1217, %v1320
        %v1329 = vadd.f32 %v1218, %v1254
        %v1330 = vadd.f32 %v1219, %v1277
        %v1331 = vadd.f32 %v1220, %v1300
        %v1332 = vadd.f32 %v1221, %v1323
        %v1333 = vld [vmem:[%s2] sm:$0xf]
        %v1335 = vperm.slane %v1333, 0
        %v1336 = vperm.slane %v1333, 1
        %v1337 = vperm.slane %v1333, 2
        %v1338 = vperm.slane %v1333, 3
        %v1343 = vadd.f32 %v1325, %v1335
        %v1344 = vadd.f32 %v1326, %v1336
        %v1345 = vadd.f32 %v1327, %v1337
        %v1346 = vadd.f32 %v1328, %v1338
        %v1347 = vadd.f32 %v1329, %v1335
        %v1348 = vadd.f32 %v1330, %v1336
        %v1349 = vadd.f32 %v1331, %v1337
        %v1350 = vadd.f32 %v1332, %v1338
        %v1351 = vmax.f32 %v1343, 0.0
        %v1352 = vmax.f32 %v1344, 0.0
        %v1353 = vmax.f32 %v1345, 0.0
        %v1354 = vmax.f32 %v1346, 0.0
        %v1355 = vmax.f32 %v1347, 0.0
        %v1356 = vmax.f32 %v1348, 0.0
        %v1357 = vmax.f32 %v1349, 0.0
        %v1358 = vmax.f32 %v1350, 0.0
        %v1359 = vld [vmem:[%s3] sm:$0xff]
        %v1360 = vld [vmem:[%s3 + $0x8] sm:$0xff]
        %v1361 = vld [vmem:[%s3 + $0x10] sm:$0xff]
        %v1362 = vld [vmem:[%s3 + $0x18] sm:$0xff]
        %v1363 = vld [vmem:[%s3 + $0x20] sm:$0xff]
        %v1364 = vld [vmem:[%s3 + $0x28] sm:$0xff]
        %v1365 = vld [vmem:[%s3 + $0x30] sm:$0xff]
        %v1366 = vld [vmem:[%s3 + $0x38] sm:$0xff]
        %v1367 = vld [vmem:[%s3 + $0x40] sm:$0xff]
        %v1368 = vld [vmem:[%s3 + $0x48] sm:$0xff]
        %v1369 = vld [vmem:[%s3 + $0x50] sm:$0xff]
        %v1370 = vld [vmem:[%s3 + $0x58] sm:$0xff]
        %v1371 = vld [vmem:[%s3 + $0x60] sm:$0xff]
        %v1372 = vld [vmem:[%s3 + $0x68] sm:$0xff]
        %v1373 = vld [vmem:[%s3 + $0x70] sm:$0xff]
        %v1374 = vld [vmem:[%s3 + $0x78] sm:$0xff]
        %v1375 = vld [vmem:[%s3 + $0x80] sm:$0xff]
        %v1376 = vld [vmem:[%s3 + $0x88] sm:$0xff]
        %v1377 = vld [vmem:[%s3 + $0x90] sm:$0xff]
        %v1378 = vld [vmem:[%s3 + $0x98] sm:$0xff]
        %v1379 = vld [vmem:[%s3 + $0xa0] sm:$0xff]
        %v1380 = vld [vmem:[%s3 + $0xa8] sm:$0xff]
        %v1381 = vld [vmem:[%s3 + $0xb0] sm:$0xff]
        %v1382 = vld [vmem:[%s3 + $0xb8] sm:$0xff]
        %v1383 = vld [vmem:[%s3 + $0xc0] sm:$0xff]
        %v1384 = vld [vmem:[%s3 + $0xc8] sm:$0xff]
        %v1385 = vld [vmem:[%s3 + $0xd0] sm:$0xff]
        %v1386 = vld [vmem:[%s3 + $0xd8] sm:$0xff]
        %v1387 = vld [vmem:[%s3 + $0xe0] sm:$0xff]
        %v1388 = vld [vmem:[%s3 + $0xe8] sm:$0xff]
        %v1389 = vld [vmem:[%s3 + $0xf0] sm:$0xff]
        %v1390 = vld [vmem:[%s3 + $0xf8] sm:$0xff]
        %v1391 = vld [vmem:[%s3 + $0x100] sm:$0xff]
        %v1392 = vld [vmem:[%s3 + $0x108] sm:$0xff]
        %v1393 = vld [vmem:[%s3 + $0x110] sm:$0xff]
        %v1394 = vld [vmem:[%s3 + $0x118] sm:$0xff]
        %v1395 = vld [vmem:[%s3 + $0x120] sm:$0xff]
        %v1396 = vld [vmem:[%s3 + $0x128] sm:$0xff]
        %v1397 = vld [vmem:[%s3 + $0x130] sm:$0xff]
        %v1398 = vld [vmem:[%s3 + $0x138] sm:$0xff]
        %v1399 = vld [vmem:[%s3 + $0x140] sm:$0xff]
        %v1400 = vld [vmem:[%s3 + $0x148] sm:$0xff]
        %v1401 = vld [vmem:[%s3 + $0x150] sm:$0xff]
        %v1402 = vld [vmem:[%s3 + $0x158] sm:$0xff]
        %v1403 = vld [vmem:[%s3 + $0x160] sm:$0xff]
        %v1404 = vld [vmem:[%s3 + $0x168] sm:$0xff]
        %v1405 = vld [vmem:[%s3 + $0x170] sm:$0xff]
        %v1406 = vld [vmem:[%s3 + $0x178] sm:$0xff]
        %v1407 = vld [vmem:[%s3 + $0x180] sm:$0xff]
        %v1408 = vld [vmem:[%s3 + $0x188] sm:$0xff]
        %v1409 = vld [vmem:[%s3 + $0x190] sm:$0xff]
        %v1410 = vld [vmem:[%s3 + $0x198] sm:$0xff]
        %v1411 = vld [vmem:[%s3 + $0x1a0] sm:$0xff]
        %v1412 = vld [vmem:[%s3 + $0x1a8] sm:$0xff]
        %v1413 = vld [vmem:[%s3 + $0x1b0] sm:$0xff]
        %v1414 = vld [vmem:[%s3 + $0x1b8] sm:$0xff]
        %v1415 = vld [vmem:[%s3 + $0x1c0] sm:$0xff]
        %v1416 = vld [vmem:[%s3 + $0x1c8] sm:$0xff]
        %v1417 = vld [vmem:[%s3 + $0x1d0] sm:$0xff]
        %v1418 = vld [vmem:[%s3 + $0x1d8] sm:$0xff]
        %v1419 = vld [vmem:[%s3 + $0x1e0] sm:$0xff]
        %v1420 = vld [vmem:[%s3 + $0x1e8] sm:$0xff]
        %v1421 = vld [vmem:[%s3 + $0x1f0] sm:$0xff]
        %v1422 = vld [vmem:[%s3 + $0x1f8] sm:$0xff]
        %v1423 = vld [vmem:[%s3 + $0x200] sm:$0xff]
        %v1424 = vld [vmem:[%s3 + $0x208] sm:$0xff]
        %v1425 = vld [vmem:[%s3 + $0x210] sm:$0xff]
        %v1426 = vld [vmem:[%s3 + $0x218] sm:$0xff]
        %v1427 = vld [vmem:[%s3 + $0x220] sm:$0xff]
        %v1428 = vld [vmem:[%s3 + $0x228] sm:$0xff]
        %v1429 = vld [vmem:[%s3 + $0x230] sm:$0xff]
        %v1430 = vld [vmem:[%s3 + $0x238] sm:$0xff]
        %v1431 = vld [vmem:[%s3 + $0x240] sm:$0xff]
        %v1432 = vld [vmem:[%s3 + $0x248] sm:$0xff]
        %v1433 = vld [vmem:[%s3 + $0x250] sm:$0xff]
        %v1434 = vld [vmem:[%s3 + $0x258] sm:$0xff]
        %v1435 = vld [vmem:[%s3 + $0x260] sm:$0xff]
        %v1436 = vld [vmem:[%s3 + $0x268] sm:$0xff]
        %v1437 = vld [vmem:[%s3 + $0x270] sm:$0xff]
        %v1438 = vld [vmem:[%s3 + $0x278] sm:$0xff]
        %v1439 = vld [vmem:[%s3 + $0x280] sm:$0xff]
        %v1440 = vld [vmem:[%s3 + $0x288] sm:$0xff]
        %v1441 = vld [vmem:[%s3 + $0x290] sm:$0xff]
        %v1442 = vld [vmem:[%s3 + $0x298] sm:$0xff]
        %v1443 = vld [vmem:[%s3 + $0x2a0] sm:$0xff]
        %v1444 = vld [vmem:[%s3 + $0x2a8] sm:$0xff]
        %v1445 = vld [vmem:[%s3 + $0x2b0] sm:$0xff]
        %v1446 = vld [vmem:[%s3 + $0x2b8] sm:$0xff]
        %v1447 = vld [vmem:[%s3 + $0x2c0] sm:$0xff]
        %v1448 = vld [vmem:[%s3 + $0x2c8] sm:$0xff]
        %v1449 = vld [vmem:[%s3 + $0x2d0] sm:$0xff]
        %v1450 = vld [vmem:[%s3 + $0x2d8] sm:$0xff]
        %v1451 = vld [vmem:[%s3 + $0x2e0] sm:$0xff]
        %v1452 = vld [vmem:[%s3 + $0x2e8] sm:$0xff]
        %v1453 = vld [vmem:[%s3 + $0x2f0] sm:$0xff]
        %v1454 = vld [vmem:[%s3 + $0x2f8] sm:$0xff]
        %v1455 = vld [vmem:[%s3 + $0x300] sm:$0xff]
        %v1456 = vld [vmem:[%s3 + $0x308] sm:$0xff]
        %v1457 = vld [vmem:[%s3 + $0x310] sm:$0xff]
        %v1458 = vld [vmem:[%s3 + $0x318] sm:$0xff]
        %v1459 = vld [vmem:[%s3 + $0x320] sm:$0xff]
        %v1460 = vld [vmem:[%s3 + $0x328] sm:$0xff]
        %v1461 = vld [vmem:[%s3 + $0x330] sm:$0xff]
        %v1462 = vld [vmem:[%s3 + $0x338] sm:$0xff]
        %v1463 = vld [vmem:[%s3 + $0x340] sm:$0xff]
        %v1464 = vld [vmem:[%s3 + $0x348] sm:$0xff]
        %v1465 = vld [vmem:[%s3 + $0x350] sm:$0xff]
        %v1466 = vld [vmem:[%s3 + $0x358] sm:$0xff]
        %v1467 = vld [vmem:[%s3 + $0x360] sm:$0xff]
        %v1468 = vld [vmem:[%s3 + $0x368] sm:$0xff]
        %v1469 = vld [vmem:[%s3 + $0x370] sm:$0xff]
        %v1470 = vld [vmem:[%s3 + $0x378] sm:$0xff]
        %v1471 = vld [vmem:[%s3 + $0x380] sm:$0xff]
        %v1472 = vld [vmem:[%s3 + $0x388] sm:$0xff]
        %v1473 = vld [vmem:[%s3 + $0x390] sm:$0xff]
        %v1474 = vld [vmem:[%s3 + $0x398] sm:$0xff]
        %v1475 = vld [vmem:[%s3 + $0x3a0] sm:$0xff]
        %v1476 = vld [vmem:[%s3 + $0x3a8] sm:$0xff]
        %v1477 = vld [vmem:[%s3 + $0x3b0] sm:$0xff]
        %v1478 = vld [vmem:[%s3 + $0x3b8] sm:$0xff]
        %v1479 = vld [vmem:[%s3 + $0x3c0] sm:$0xff]
        %v1480 = vld [vmem:[%s3 + $0x3c8] sm:$0xff]
        %v1481 = vld [vmem:[%s3 + $0x3d0] sm:$0xff]
        %v1482 = vld [vmem:[%s3 + $0x3d8] sm:$0xff]
        %v1483 = vld [vmem:[%s3 + $0x3e0] sm:$0xff]
        %v1484 = vld [vmem:[%s3 + $0x3e8] sm:$0xff]
        %v1485 = vld [vmem:[%s3 + $0x3f0] sm:$0xff]
        %v1486 = vld [vmem:[%s3 + $0x3f8] sm:$0xff]
        %v1487 = vld [vmem:[%s4] sm:$0x3]
        %v1489 = vperm.slane %v1487, 0
        %v1490 = vperm.slane %v1487, 1
        %1493 = vmatpush.msra.mxu0 %v1389
        %1494 = vmatpush.msra.mxu0 %v1387
        %1495 = vmatpush.msra.mxu0 %v1385
        %1496 = vmatpush.msra.mxu0 %v1383
        %1497 = vmatpush.msra.mxu0 %v1381
        %1498 = vmatpush.msra.mxu0 %v1379
        %1499 = vmatpush.msra.mxu0 %v1377
        %1500 = vmatpush.msra.mxu0 %v1375
        %1501 = vmatpush.msra.mxu0 %v1373
        %1502 = vmatpush.msra.mxu0 %v1371
        %1503 = vmatpush.msra.mxu0 %v1369
        %1504 = vmatpush.msra.mxu0 %v1367
        %1505 = vmatpush.msra.mxu0 %v1365
        %1506 = vmatpush.msra.mxu0 %v1363
        %1507 = vmatpush.msra.mxu0 %v1361
        %1508 = vmatpush.msra.mxu0 %v1359
        %1509 = vmatmul.f32.gmra.mxu0 %v1351
        %v1510 = vpop.f32.mrf.mxu0
        %v1511 = vadd.f32 %v1489, %v1510
        %1512 = vmatmul.f32.gmra.mxu0 %v1355
        %v1513 = vpop.f32.mrf.mxu0
        %v1514 = vadd.f32 %v1489, %v1513
        %1515 = vdwg.mxu0
        %1516 = vmatpush.msra.mxu0 %v1421
        %1517 = vmatpush.msra.mxu0 %v1419
        %1518 = vmatpush.msra.mxu0 %v1417
        %1519 = vmatpush.msra.mxu0 %v1415
        %1520 = vmatpush.msra.mxu0 %v1413
        %1521 = vmatpush.msra.mxu0 %v1411
        %1522 = vmatpush.msra.mxu0 %v1409
        %1523 = vmatpush.msra.mxu0 %v1407
        %1524 = vmatpush.msra.mxu0 %v1405
        %1525 = vmatpush.msra.mxu0 %v1403
        %1526 = vmatpush.msra.mxu0 %v1401
        %1527 = vmatpush.msra.mxu0 %v1399
        %1528 = vmatpush.msra.mxu0 %v1397
        %1529 = vmatpush.msra.mxu0 %v1395
        %1530 = vmatpush.msra.mxu0 %v1393
        %1531 = vmatpush.msra.mxu0 %v1391
        %1532 = vmatmul.f32.gmra.mxu0 %v1352
        %v1533 = vpop.f32.mrf.mxu0
        %v1534 = vadd.f32 %v1511, %v1533
        %1535 = vmatmul.f32.gmra.mxu0 %v1356
        %v1536 = vpop.f32.mrf.mxu0
        %v1537 = vadd.f32 %v1514, %v1536
        %1538 = vdwg.mxu0
        %1539 = vmatpush.msra.mxu0 %v1453
        %1540 = vmatpush.msra.mxu0 %v1451
        %1541 = vmatpush.msra.mxu0 %v1449
        %1542 = vmatpush.msra.mxu0 %v1447
        %1543 = vmatpush.msra.mxu0 %v1445
        %1544 = vmatpush.msra.mxu0 %v1443
        %1545 = vmatpush.msra.mxu0 %v1441
        %1546 = vmatpush.msra.mxu0 %v1439
        %1547 = vmatpush.msra.mxu0 %v1437
        %1548 = vmatpush.msra.mxu0 %v1435
        %1549 = vmatpush.msra.mxu0 %v1433
        %1550 = vmatpush.msra.mxu0 %v1431
        %1551 = vmatpush.msra.mxu0 %v1429
        %1552 = vmatpush.msra.mxu0 %v1427
        %1553 = vmatpush.msra.mxu0 %v1425
        %1554 = vmatpush.msra.mxu0 %v1423
        %1555 = vmatmul.f32.gmra.mxu0 %v1353
        %v1556 = vpop.f32.mrf.mxu0
        %v1557 = vadd.f32 %v1534, %v1556
        %1558 = vmatmul.f32.gmra.mxu0 %v1357
        %v1559 = vpop.f32.mrf.mxu0
        %v1560 = vadd.f32 %v1537, %v1559
        %1561 = vdwg.mxu0
        %1562 = vmatpush.msra.mxu0 %v1485
        %1563 = vmatpush.msra.mxu0 %v1483
        %1564 = vmatpush.msra.mxu0 %v1481
        %1565 = vmatpush.msra.mxu0 %v1479
        %1566 = vmatpush.msra.mxu0 %v1477
        %1567 = vmatpush.msra.mxu0 %v1475
        %1568 = vmatpush.msra.mxu0 %v1473
        %1569 = vmatpush.msra.mxu0 %v1471
        %1570 = vmatpush.msra.mxu0 %v1469
        %1571 = vmatpush.msra.mxu0 %v1467
        %1572 = vmatpush.msra.mxu0 %v1465
        %1573 = vmatpush.msra.mxu0 %v1463
        %1574 = vmatpush.msra.mxu0 %v1461
        %1575 = vmatpush.msra.mxu0 %v1459
        %1576 = vmatpush.msra.mxu0 %v1457
        %1577 = vmatpush.msra.mxu0 %v1455
        %1578 = vmatmul.f32.gmra.mxu0 %v1354
        %v1579 = vpop.f32.mrf.mxu0
        %v1580 = vadd.f32 %v1557, %v1579
        %1581 = vmatmul.f32.gmra.mxu0 %v1358
        %v1582 = vpop.f32.mrf.mxu0
        %v1583 = vadd.f32 %v1560, %v1582
        %1584 = vdwg.mxu0
        %1585 = vmatpush.msra.mxu0 %v1390
        %1586 = vmatpush.msra.mxu0 %v1388
        %1587 = vmatpush.msra.mxu0 %v1386
        %1588 = vmatpush.msra.mxu0 %v1384
        %1589 = vmatpush.msra.mxu0 %v1382
        %1590 = vmatpush.msra.mxu0 %v1380
        %1591 = vmatpush.msra.mxu0 %v1378
        %1592 = vmatpush.msra.mxu0 %v1376
        %1593 = vmatpush.msra.mxu0 %v1374
        %1594 = vmatpush.msra.mxu0 %v1372
        %1595 = vmatpush.msra.mxu0 %v1370
        %1596 = vmatpush.msra.mxu0 %v1368
        %1597 = vmatpush.msra.mxu0 %v1366
        %1598 = vmatpush.msra.mxu0 %v1364
        %1599 = vmatpush.msra.mxu0 %v1362
        %1600 = vmatpush.msra.mxu0 %v1360
        %1601 = vmatmul.f32.gmra.mxu0 %v1351
        %v1602 = vpop.f32.mrf.mxu0
        %v1603 = vadd.f32 %v1490, %v1602
        %1604 = vmatmul.f32.gmra.mxu0 %v1355
        %v1605 = vpop.f32.mrf.mxu0
        %v1606 = vadd.f32 %v1490, %v1605
        %1607 = vdwg.mxu0
        %1608 = vmatpush.msra.mxu0 %v1422
        %1609 = vmatpush.msra.mxu0 %v1420
        %1610 = vmatpush.msra.mxu0 %v1418
        %1611 = vmatpush.msra.mxu0 %v1416
        %1612 = vmatpush.msra.mxu0 %v1414
        %1613 = vmatpush.msra.mxu0 %v1412
        %1614 = vmatpush.msra.mxu0 %v1410
        %1615 = vmatpush.msra.mxu0 %v1408
        %1616 = vmatpush.msra.mxu0 %v1406
        %1617 = vmatpush.msra.mxu0 %v1404
        %1618 = vmatpush.msra.mxu0 %v1402
        %1619 = vmatpush.msra.mxu0 %v1400
        %1620 = vmatpush.msra.mxu0 %v1398
        %1621 = vmatpush.msra.mxu0 %v1396
        %1622 = vmatpush.msra.mxu0 %v1394
        %1623 = vmatpush.msra.mxu0 %v1392
        %1624 = vmatmul.f32.gmra.mxu0 %v1352
        %v1625 = vpop.f32.mrf.mxu0
        %v1626 = vadd.f32 %v1603, %v1625
        %1627 = vmatmul.f32.gmra.mxu0 %v1356
        %v1628 = vpop.f32.mrf.mxu0
        %v1629 = vadd.f32 %v1606, %v1628
        %1630 = vdwg.mxu0
        %1631 = vmatpush.msra.mxu0 %v1454
        %1632 = vmatpush.msra.mxu0 %v1452
        %1633 = vmatpush.msra.mxu0 %v1450
        %1634 = vmatpush.msra.mxu0 %v1448
        %1635 = vmatpush.msra.mxu0 %v1446
        %1636 = vmatpush.msra.mxu0 %v1444
        %1637 = vmatpush.msra.mxu0 %v1442
        %1638 = vmatpush.msra.mxu0 %v1440
        %1639 = vmatpush.msra.mxu0 %v1438
        %1640 = vmatpush.msra.mxu0 %v1436
        %1641 = vmatpush.msra.mxu0 %v1434
        %1642 = vmatpush.msra.mxu0 %v1432
        %1643 = vmatpush.msra.mxu0 %v1430
        %1644 = vmatpush.msra.mxu0 %v1428
        %1645 = vmatpush.msra.mxu0 %v1426
        %1646 = vmatpush.msra.mxu0 %v1424
        %1647 = vmatmul.f32.gmra.mxu0 %v1353
        %v1648 = vpop.f32.mrf.mxu0
        %v1649 = vadd.f32 %v1626, %v1648
        %1650 = vmatmul.f32.gmra.mxu0 %v1357
        %v1651 = vpop.f32.mrf.mxu0
        %v1652 = vadd.f32 %v1629, %v1651
        %1653 = vdwg.mxu0
        %1654 = vmatpush.msra.mxu0 %v1486
        %1655 = vmatpush.msra.mxu0 %v1484
        %1656 = vmatpush.msra.mxu0 %v1482
        %1657 = vmatpush.msra.mxu0 %v1480
        %1658 = vmatpush.msra.mxu0 %v1478
        %1659 = vmatpush.msra.mxu0 %v1476
        %1660 = vmatpush.msra.mxu0 %v1474
        %1661 = vmatpush.msra.mxu0 %v1472
        %1662 = vmatpush.msra.mxu0 %v1470
        %1663 = vmatpush.msra.mxu0 %v1468
        %1664 = vmatpush.msra.mxu0 %v1466
        %1665 = vmatpush.msra.mxu0 %v1464
        %1666 = vmatpush.msra.mxu0 %v1462
        %1667 = vmatpush.msra.mxu0 %v1460
        %1668 = vmatpush.msra.mxu0 %v1458
        %1669 = vmatpush.msra.mxu0 %v1456
        %1670 = vmatmul.f32.gmra.mxu0 %v1354
        %v1671 = vpop.f32.mrf.mxu0
        %v1672 = vadd.f32 %v1649, %v1671
        %1673 = vmatmul.f32.gmra.mxu0 %v1358
        %v1674 = vpop.f32.mrf.mxu0
        %v1675 = vadd.f32 %v1652, %v1674
        %1676 = vdwg.mxu0
        %v1677 = vmax.f32 %v1580, 0.0
        %v1678 = vmax.f32 %v1672, 0.0
        %v1679 = vmax.f32 %v1583, 0.0
        %v1680 = vmax.f32 %v1675, 0.0
        %v1685 = vrot.slane %v1677, 6
        %v1686 = vrot.slane %v1678, 6
        %v1687 = vrot.slane %v1679, 6
        %v1688 = vsel %vm993, %v1685, %v1687
        %v1689 = vrot.slane %v1680, 6
        %v1690 = vsel %vm993, %v1686, %v1689
        %v1697 = vsel %vm993, 0.0, %v1685
        %v1698 = vsel %vm993, 0.0, %v1686
        %v1699 = vsel %vm993, %v1687, 0.0
        %v1700 = vsel %vm993, %v1689, 0.0
        %v1705 = vrot.slane %v1697, 1
        %v1706 = vrot.slane %v1688, 1
        %v1707 = vsel %vm310, %v1705, %v1706
        %v1708 = vrot.slane %v1698, 1
        %v1709 = vrot.slane %v1690, 1
        %v1710 = vsel %vm310, %v1708, %v1709
        %v1711 = vrot.slane %v1699, 1
        %v1712 = vsel %vm310, %v1706, %v1711
        %v1713 = vrot.slane %v1700, 1
        %v1714 = vsel %vm310, %v1709, %v1713
        %v1719 = vrot.slane %v1697, 2
        %v1720 = vrot.slane %v1688, 2
        %v1721 = vsel %vm518, %v1719, %v1720
        %v1722 = vrot.slane %v1698, 2
        %v1723 = vrot.slane %v1690, 2
        %v1724 = vsel %vm518, %v1722, %v1723
        %v1725 = vrot.slane %v1699, 2
        %v1726 = vsel %vm518, %v1720, %v1725
        %v1727 = vrot.slane %v1700, 2
        %v1728 = vsel %vm518, %v1723, %v1727
        %v1733 = vrot.slane %v1697, 3
        %v1734 = vrot.slane %v1688, 3
        %v1735 = vsel %vm637, %v1733, %v1734
        %v1736 = vrot.slane %v1698, 3
        %v1737 = vrot.slane %v1690, 3
        %v1738 = vsel %vm637, %v1736, %v1737
        %v1739 = vrot.slane %v1699, 3
        %v1740 = vsel %vm637, %v1734, %v1739
        %v1741 = vrot.slane %v1700, 3
        %v1742 = vsel %vm637, %v1737, %v1741
        %v1747 = vrot.slane %v1697, 4
        %v1748 = vrot.slane %v1688, 4
        %v1749 = vsel %vm283, %v1747, %v1748
        %v1750 = vrot.slane %v1698, 4
        %v1751 = vrot.slane %v1690, 4
        %v1752 = vsel %vm283, %v1750, %v1751
        %v1753 = vrot.slane %v1699, 4
        %v1754 = vsel %vm283, %v1748, %v1753
        %v1755 = vrot.slane %v1700, 4
        %v1756 = vsel %vm283, %v1751, %v1755
        %v1761 = vld [vmem:[%s5] sm:$0xff]
        %v1762 = vld [vmem:[%s5 + $0x8] sm:$0xff]
        %v1763 = vld [vmem:[%s5 + $0x10] sm:$0xff]
        %v1764 = vld [vmem:[%s5 + $0x18] sm:$0xff]
        %v1765 = vld [vmem:[%s5 + $0x20] sm:$0xff]
        %v1766 = vld [vmem:[%s5 + $0x28] sm:$0xff]
        %v1767 = vld [vmem:[%s5 + $0x30] sm:$0xff]
        %v1768 = vld [vmem:[%s5 + $0x38] sm:$0xff]
        %v1769 = vld [vmem:[%s5 + $0x40] sm:$0xff]
        %v1770 = vld [vmem:[%s5 + $0x48] sm:$0xff]
        %v1771 = vld [vmem:[%s5 + $0x50] sm:$0xff]
        %v1772 = vld [vmem:[%s5 + $0x58] sm:$0xff]
        %v1773 = vld [vmem:[%s5 + $0x60] sm:$0xff]
        %v1774 = vld [vmem:[%s5 + $0x68] sm:$0xff]
        %v1775 = vld [vmem:[%s5 + $0x70] sm:$0xff]
        %v1776 = vld [vmem:[%s5 + $0x78] sm:$0xff]
        %v1777 = vld [vmem:[%s5 + $0x80] sm:$0xff]
        %v1778 = vld [vmem:[%s5 + $0x88] sm:$0xff]
        %v1779 = vld [vmem:[%s5 + $0x90] sm:$0xff]
        %v1780 = vld [vmem:[%s5 + $0x98] sm:$0xff]
        %v1781 = vld [vmem:[%s5 + $0xa0] sm:$0xff]
        %v1782 = vld [vmem:[%s5 + $0xa8] sm:$0xff]
        %v1783 = vld [vmem:[%s5 + $0xb0] sm:$0xff]
        %v1784 = vld [vmem:[%s5 + $0xb8] sm:$0xff]
        %v1785 = vld [vmem:[%s5 + $0xc0] sm:$0xff]
        %v1786 = vld [vmem:[%s5 + $0xc8] sm:$0xff]
        %v1787 = vld [vmem:[%s5 + $0xd0] sm:$0xff]
        %v1788 = vld [vmem:[%s5 + $0xd8] sm:$0xff]
        %v1789 = vld [vmem:[%s5 + $0xe0] sm:$0xff]
        %v1790 = vld [vmem:[%s5 + $0xe8] sm:$0xff]
        %v1791 = vld [vmem:[%s5 + $0xf0] sm:$0xff]
        %v1792 = vld [vmem:[%s5 + $0xf8] sm:$0xff]
        %v1793 = vld [vmem:[%s5 + $0x100] sm:$0xff]
        %v1794 = vld [vmem:[%s5 + $0x108] sm:$0xff]
        %v1795 = vld [vmem:[%s5 + $0x110] sm:$0xff]
        %v1796 = vld [vmem:[%s5 + $0x118] sm:$0xff]
        %v1797 = vld [vmem:[%s5 + $0x120] sm:$0xff]
        %v1798 = vld [vmem:[%s5 + $0x128] sm:$0xff]
        %v1799 = vld [vmem:[%s5 + $0x130] sm:$0xff]
        %v1800 = vld [vmem:[%s5 + $0x138] sm:$0xff]
        %v1801 = vld [vmem:[%s5 + $0x140] sm:$0xff]
        %v1802 = vld [vmem:[%s5 + $0x148] sm:$0xff]
        %v1803 = vld [vmem:[%s5 + $0x150] sm:$0xff]
        %v1804 = vld [vmem:[%s5 + $0x158] sm:$0xff]
        %v1805 = vld [vmem:[%s5 + $0x160] sm:$0xff]
        %v1806 = vld [vmem:[%s5 + $0x168] sm:$0xff]
        %v1807 = vld [vmem:[%s5 + $0x170] sm:$0xff]
        %v1808 = vld [vmem:[%s5 + $0x178] sm:$0xff]
        %v1809 = vld [vmem:[%s5 + $0x180] sm:$0xff]
        %v1810 = vld [vmem:[%s5 + $0x188] sm:$0xff]
        %v1811 = vld [vmem:[%s5 + $0x190] sm:$0xff]
        %v1812 = vld [vmem:[%s5 + $0x198] sm:$0xff]
        %v1813 = vld [vmem:[%s5 + $0x1a0] sm:$0xff]
        %v1814 = vld [vmem:[%s5 + $0x1a8] sm:$0xff]
        %v1815 = vld [vmem:[%s5 + $0x1b0] sm:$0xff]
        %v1816 = vld [vmem:[%s5 + $0x1b8] sm:$0xff]
        %v1817 = vld [vmem:[%s5 + $0x1c0] sm:$0xff]
        %v1818 = vld [vmem:[%s5 + $0x1c8] sm:$0xff]
        %v1819 = vld [vmem:[%s5 + $0x1d0] sm:$0xff]
        %v1820 = vld [vmem:[%s5 + $0x1d8] sm:$0xff]
        %v1821 = vld [vmem:[%s5 + $0x1e0] sm:$0xff]
        %v1822 = vld [vmem:[%s5 + $0x1e8] sm:$0xff]
        %v1823 = vld [vmem:[%s5 + $0x1f0] sm:$0xff]
        %v1824 = vld [vmem:[%s5 + $0x1f8] sm:$0xff]
        %v1825 = vld [vmem:[%s5 + $0x200] sm:$0xff]
        %v1826 = vld [vmem:[%s5 + $0x208] sm:$0xff]
        %v1827 = vld [vmem:[%s5 + $0x210] sm:$0xff]
        %v1828 = vld [vmem:[%s5 + $0x218] sm:$0xff]
        %v1829 = vld [vmem:[%s5 + $0x220] sm:$0xff]
        %v1830 = vld [vmem:[%s5 + $0x228] sm:$0xff]
        %v1831 = vld [vmem:[%s5 + $0x230] sm:$0xff]
        %v1832 = vld [vmem:[%s5 + $0x238] sm:$0xff]
        %v1833 = vld [vmem:[%s5 + $0x240] sm:$0xff]
        %v1834 = vld [vmem:[%s5 + $0x248] sm:$0xff]
        %v1835 = vld [vmem:[%s5 + $0x250] sm:$0xff]
        %v1836 = vld [vmem:[%s5 + $0x258] sm:$0xff]
        %v1837 = vld [vmem:[%s5 + $0x260] sm:$0xff]
        %v1838 = vld [vmem:[%s5 + $0x268] sm:$0xff]
        %v1839 = vld [vmem:[%s5 + $0x270] sm:$0xff]
        %v1840 = vld [vmem:[%s5 + $0x278] sm:$0xff]
        %v1841 = vld [vmem:[%s5 + $0x280] sm:$0xff]
        %v1842 = vld [vmem:[%s5 + $0x288] sm:$0xff]
        %v1843 = vld [vmem:[%s5 + $0x290] sm:$0xff]
        %v1844 = vld [vmem:[%s5 + $0x298] sm:$0xff]
        %v1845 = vld [vmem:[%s5 + $0x2a0] sm:$0xff]
        %v1846 = vld [vmem:[%s5 + $0x2a8] sm:$0xff]
        %v1847 = vld [vmem:[%s5 + $0x2b0] sm:$0xff]
        %v1848 = vld [vmem:[%s5 + $0x2b8] sm:$0xff]
        %v1849 = vld [vmem:[%s5 + $0x2c0] sm:$0xff]
        %v1850 = vld [vmem:[%s5 + $0x2c8] sm:$0xff]
        %v1851 = vld [vmem:[%s5 + $0x2d0] sm:$0xff]
        %v1852 = vld [vmem:[%s5 + $0x2d8] sm:$0xff]
        %v1853 = vld [vmem:[%s5 + $0x2e0] sm:$0xff]
        %v1854 = vld [vmem:[%s5 + $0x2e8] sm:$0xff]
        %v1855 = vld [vmem:[%s5 + $0x2f0] sm:$0xff]
        %v1856 = vld [vmem:[%s5 + $0x2f8] sm:$0xff]
        %v1857 = vld [vmem:[%s5 + $0x300] sm:$0xff]
        %v1858 = vld [vmem:[%s5 + $0x308] sm:$0xff]
        %v1859 = vld [vmem:[%s5 + $0x310] sm:$0xff]
        %v1860 = vld [vmem:[%s5 + $0x318] sm:$0xff]
        %v1861 = vld [vmem:[%s5 + $0x320] sm:$0xff]
        %v1862 = vld [vmem:[%s5 + $0x328] sm:$0xff]
        %v1863 = vld [vmem:[%s5 + $0x330] sm:$0xff]
        %v1864 = vld [vmem:[%s5 + $0x338] sm:$0xff]
        %v1865 = vld [vmem:[%s5 + $0x340] sm:$0xff]
        %v1866 = vld [vmem:[%s5 + $0x348] sm:$0xff]
        %v1867 = vld [vmem:[%s5 + $0x350] sm:$0xff]
        %v1868 = vld [vmem:[%s5 + $0x358] sm:$0xff]
        %v1869 = vld [vmem:[%s5 + $0x360] sm:$0xff]
        %v1870 = vld [vmem:[%s5 + $0x368] sm:$0xff]
        %v1871 = vld [vmem:[%s5 + $0x370] sm:$0xff]
        %v1872 = vld [vmem:[%s5 + $0x378] sm:$0xff]
        %v1873 = vld [vmem:[%s5 + $0x380] sm:$0xff]
        %v1874 = vld [vmem:[%s5 + $0x388] sm:$0xff]
        %v1875 = vld [vmem:[%s5 + $0x390] sm:$0xff]
        %v1876 = vld [vmem:[%s5 + $0x398] sm:$0xff]
        %v1877 = vld [vmem:[%s5 + $0x3a0] sm:$0xff]
        %v1878 = vld [vmem:[%s5 + $0x3a8] sm:$0xff]
        %v1879 = vld [vmem:[%s5 + $0x3b0] sm:$0xff]
        %v1880 = vld [vmem:[%s5 + $0x3b8] sm:$0xff]
        %v1881 = vld [vmem:[%s5 + $0x3c0] sm:$0xff]
        %v1882 = vld [vmem:[%s5 + $0x3c8] sm:$0xff]
        %v1883 = vld [vmem:[%s5 + $0x3d0] sm:$0xff]
        %v1884 = vld [vmem:[%s5 + $0x3d8] sm:$0xff]
        %v1885 = vld [vmem:[%s5 + $0x3e0] sm:$0xff]
        %v1886 = vld [vmem:[%s5 + $0x3e8] sm:$0xff]
        %v1887 = vld [vmem:[%s5 + $0x3f0] sm:$0xff]
        %v1888 = vld [vmem:[%s5 + $0x3f8] sm:$0xff]
        %v1889 = vld [vmem:[%s5 + $0x400] sm:$0xff]
        %v1890 = vld [vmem:[%s5 + $0x408] sm:$0xff]
        %v1891 = vld [vmem:[%s5 + $0x410] sm:$0xff]
        %v1892 = vld [vmem:[%s5 + $0x418] sm:$0xff]
        %v1893 = vld [vmem:[%s5 + $0x420] sm:$0xff]
        %v1894 = vld [vmem:[%s5 + $0x428] sm:$0xff]
        %v1895 = vld [vmem:[%s5 + $0x430] sm:$0xff]
        %v1896 = vld [vmem:[%s5 + $0x438] sm:$0xff]
        %v1897 = vld [vmem:[%s5 + $0x440] sm:$0xff]
        %v1898 = vld [vmem:[%s5 + $0x448] sm:$0xff]
        %v1899 = vld [vmem:[%s5 + $0x450] sm:$0xff]
        %v1900 = vld [vmem:[%s5 + $0x458] sm:$0xff]
        %v1901 = vld [vmem:[%s5 + $0x460] sm:$0xff]
        %v1902 = vld [vmem:[%s5 + $0x468] sm:$0xff]
        %v1903 = vld [vmem:[%s5 + $0x470] sm:$0xff]
        %v1904 = vld [vmem:[%s5 + $0x478] sm:$0xff]
        %v1905 = vld [vmem:[%s5 + $0x480] sm:$0xff]
        %v1906 = vld [vmem:[%s5 + $0x488] sm:$0xff]
        %v1907 = vld [vmem:[%s5 + $0x490] sm:$0xff]
        %v1908 = vld [vmem:[%s5 + $0x498] sm:$0xff]
        %v1909 = vld [vmem:[%s5 + $0x4a0] sm:$0xff]
        %v1910 = vld [vmem:[%s5 + $0x4a8] sm:$0xff]
        %v1911 = vld [vmem:[%s5 + $0x4b0] sm:$0xff]
        %v1912 = vld [vmem:[%s5 + $0x4b8] sm:$0xff]
        %v1913 = vld [vmem:[%s5 + $0x4c0] sm:$0xff]
        %v1914 = vld [vmem:[%s5 + $0x4c8] sm:$0xff]
        %v1915 = vld [vmem:[%s5 + $0x4d0] sm:$0xff]
        %v1916 = vld [vmem:[%s5 + $0x4d8] sm:$0xff]
        %v1917 = vld [vmem:[%s5 + $0x4e0] sm:$0xff]
        %v1918 = vld [vmem:[%s5 + $0x4e8] sm:$0xff]
        %v1919 = vld [vmem:[%s5 + $0x4f0] sm:$0xff]
        %v1920 = vld [vmem:[%s5 + $0x4f8] sm:$0xff]
        %v1921 = vld [vmem:[#allocation2] sm:$0x1]
        %v1923 = vperm.slane %v1921, 0
        %1924 = vset.pattern.permute.xlu0 0
        %1925 = vperm.xlu0 %1924, %v1923
        %v1926 = vpop.permute.xlu0 %1925
        %1928 = vmatpush.msra.mxu0 %v1776
        %1929 = vmatpush.msra.mxu0 %v1775
        %1930 = vmatpush.msra.mxu0 %v1774
        %1931 = vmatpush.msra.mxu0 %v1773
        %1932 = vmatpush.msra.mxu0 %v1772
        %1933 = vmatpush.msra.mxu0 %v1771
        %1934 = vmatpush.msra.mxu0 %v1770
        %1935 = vmatpush.msra.mxu0 %v1769
        %1936 = vmatpush.msra.mxu0 %v1768
        %1937 = vmatpush.msra.mxu0 %v1767
        %1938 = vmatpush.msra.mxu0 %v1766
        %1939 = vmatpush.msra.mxu0 %v1765
        %1940 = vmatpush.msra.mxu0 %v1764
        %1941 = vmatpush.msra.mxu0 %v1763
        %1942 = vmatpush.msra.mxu0 %v1762
        %1943 = vmatpush.msra.mxu0 %v1761
        %1944 = vmatmul.f32.gmra.mxu0 %v1697
        %v1945 = vpop.f32.mrf.mxu0
        %v1946 = vadd.f32 %v1926, %v1945
        %1947 = vmatmul.f32.gmra.mxu0 %v1688
        %v1948 = vpop.f32.mrf.mxu0
        %v1949 = vadd.f32 %v1926, %v1948
        %1950 = vdwg.mxu0
        %1951 = vmatpush.msra.mxu0 %v1792
        %1952 = vmatpush.msra.mxu0 %v1791
        %1953 = vmatpush.msra.mxu0 %v1790
        %1954 = vmatpush.msra.mxu0 %v1789
        %1955 = vmatpush.msra.mxu0 %v1788
        %1956 = vmatpush.msra.mxu0 %v1787
        %1957 = vmatpush.msra.mxu0 %v1786
        %1958 = vmatpush.msra.mxu0 %v1785
        %1959 = vmatpush.msra.mxu0 %v1784
        %1960 = vmatpush.msra.mxu0 %v1783
        %1961 = vmatpush.msra.mxu0 %v1782
        %1962 = vmatpush.msra.mxu0 %v1781
        %1963 = vmatpush.msra.mxu0 %v1780
        %1964 = vmatpush.msra.mxu0 %v1779
        %1965 = vmatpush.msra.mxu0 %v1778
        %1966 = vmatpush.msra.mxu0 %v1777
        %1967 = vmatmul.f32.gmra.mxu0 %v1698
        %v1968 = vpop.f32.mrf.mxu0
        %v1969 = vadd.f32 %v1946, %v1968
        %1970 = vmatmul.f32.gmra.mxu0 %v1690
        %v1971 = vpop.f32.mrf.mxu0
        %v1972 = vadd.f32 %v1949, %v1971
        %1973 = vdwg.mxu0
        %1974 = vmatpush.msra.mxu0 %v1808
        %1975 = vmatpush.msra.mxu0 %v1807
        %1976 = vmatpush.msra.mxu0 %v1806
        %1977 = vmatpush.msra.mxu0 %v1805
        %1978 = vmatpush.msra.mxu0 %v1804
        %1979 = vmatpush.msra.mxu0 %v1803
        %1980 = vmatpush.msra.mxu0 %v1802
        %1981 = vmatpush.msra.mxu0 %v1801
        %1982 = vmatpush.msra.mxu0 %v1800
        %1983 = vmatpush.msra.mxu0 %v1799
        %1984 = vmatpush.msra.mxu0 %v1798
        %1985 = vmatpush.msra.mxu0 %v1797
        %1986 = vmatpush.msra.mxu0 %v1796
        %1987 = vmatpush.msra.mxu0 %v1795
        %1988 = vmatpush.msra.mxu0 %v1794
        %1989 = vmatpush.msra.mxu0 %v1793
        %1990 = vmatmul.f32.gmra.mxu0 %v1707
        %v1991 = vpop.f32.mrf.mxu0
        %v1992 = vadd.f32 %v1969, %v1991
        %1993 = vmatmul.f32.gmra.mxu0 %v1712
        %v1994 = vpop.f32.mrf.mxu0
        %v1995 = vadd.f32 %v1972, %v1994
        %1996 = vdwg.mxu0
        %1997 = vmatpush.msra.mxu0 %v1824
        %1998 = vmatpush.msra.mxu0 %v1823
        %1999 = vmatpush.msra.mxu0 %v1822
        %2000 = vmatpush.msra.mxu0 %v1821
        %2001 = vmatpush.msra.mxu0 %v1820
        %2002 = vmatpush.msra.mxu0 %v1819
        %2003 = vmatpush.msra.mxu0 %v1818
        %2004 = vmatpush.msra.mxu0 %v1817
        %2005 = vmatpush.msra.mxu0 %v1816
        %2006 = vmatpush.msra.mxu0 %v1815
        %2007 = vmatpush.msra.mxu0 %v1814
        %2008 = vmatpush.msra.mxu0 %v1813
        %2009 = vmatpush.msra.mxu0 %v1812
        %2010 = vmatpush.msra.mxu0 %v1811
        %2011 = vmatpush.msra.mxu0 %v1810
        %2012 = vmatpush.msra.mxu0 %v1809
        %2013 = vmatmul.f32.gmra.mxu0 %v1710
        %v2014 = vpop.f32.mrf.mxu0
        %v2015 = vadd.f32 %v1992, %v2014
        %2016 = vmatmul.f32.gmra.mxu0 %v1714
        %v2017 = vpop.f32.mrf.mxu0
        %v2018 = vadd.f32 %v1995, %v2017
        %2019 = vdwg.mxu0
        %2020 = vmatpush.msra.mxu0 %v1840
        %2021 = vmatpush.msra.mxu0 %v1839
        %2022 = vmatpush.msra.mxu0 %v1838
        %2023 = vmatpush.msra.mxu0 %v1837
        %2024 = vmatpush.msra.mxu0 %v1836
        %2025 = vmatpush.msra.mxu0 %v1835
        %2026 = vmatpush.msra.mxu0 %v1834
        %2027 = vmatpush.msra.mxu0 %v1833
        %2028 = vmatpush.msra.mxu0 %v1832
        %2029 = vmatpush.msra.mxu0 %v1831
        %2030 = vmatpush.msra.mxu0 %v1830
        %2031 = vmatpush.msra.mxu0 %v1829
        %2032 = vmatpush.msra.mxu0 %v1828
        %2033 = vmatpush.msra.mxu0 %v1827
        %2034 = vmatpush.msra.mxu0 %v1826
        %2035 = vmatpush.msra.mxu0 %v1825
        %2036 = vmatmul.f32.gmra.mxu0 %v1721
        %v2037 = vpop.f32.mrf.mxu0
        %v2038 = vadd.f32 %v2015, %v2037
        %2039 = vmatmul.f32.gmra.mxu0 %v1726
        %v2040 = vpop.f32.mrf.mxu0
        %v2041 = vadd.f32 %v2018, %v2040
        %2042 = vdwg.mxu0
        %2043 = vmatpush.msra.mxu0 %v1856
        %2044 = vmatpush.msra.mxu0 %v1855
        %2045 = vmatpush.msra.mxu0 %v1854
        %2046 = vmatpush.msra.mxu0 %v1853
        %2047 = vmatpush.msra.mxu0 %v1852
        %2048 = vmatpush.msra.mxu0 %v1851
        %2049 = vmatpush.msra.mxu0 %v1850
        %2050 = vmatpush.msra.mxu0 %v1849
        %2051 = vmatpush.msra.mxu0 %v1848
        %2052 = vmatpush.msra.mxu0 %v1847
        %2053 = vmatpush.msra.mxu0 %v1846
        %2054 = vmatpush.msra.mxu0 %v1845
        %2055 = vmatpush.msra.mxu0 %v1844
        %2056 = vmatpush.msra.mxu0 %v1843
        %2057 = vmatpush.msra.mxu0 %v1842
        %2058 = vmatpush.msra.mxu0 %v1841
        %2059 = vmatmul.f32.gmra.mxu0 %v1724
        %v2060 = vpop.f32.mrf.mxu0
        %v2061 = vadd.f32 %v2038, %v2060
        %2062 = vmatmul.f32.gmra.mxu0 %v1728
        %v2063 = vpop.f32.mrf.mxu0
        %v2064 = vadd.f32 %v2041, %v2063
        %2065 = vdwg.mxu0
        %2066 = vmatpush.msra.mxu0 %v1872
        %2067 = vmatpush.msra.mxu0 %v1871
        %2068 = vmatpush.msra.mxu0 %v1870
        %2069 = vmatpush.msra.mxu0 %v1869
        %2070 = vmatpush.msra.mxu0 %v1868
        %2071 = vmatpush.msra.mxu0 %v1867
        %2072 = vmatpush.msra.mxu0 %v1866
        %2073 = vmatpush.msra.mxu0 %v1865
        %2074 = vmatpush.msra.mxu0 %v1864
        %2075 = vmatpush.msra.mxu0 %v1863
        %2076 = vmatpush.msra.mxu0 %v1862
        %2077 = vmatpush.msra.mxu0 %v1861
        %2078 = vmatpush.msra.mxu0 %v1860
        %2079 = vmatpush.msra.mxu0 %v1859
        %2080 = vmatpush.msra.mxu0 %v1858
        %2081 = vmatpush.msra.mxu0 %v1857
        %2082 = vmatmul.f32.gmra.mxu0 %v1735
        %v2083 = vpop.f32.mrf.mxu0
        %v2084 = vadd.f32 %v2061, %v2083
        %2085 = vmatmul.f32.gmra.mxu0 %v1740
        %v2086 = vpop.f32.mrf.mxu0
        %v2087 = vadd.f32 %v2064, %v2086
        %2088 = vdwg.mxu0
        %2089 = vmatpush.msra.mxu0 %v1888
        %2090 = vmatpush.msra.mxu0 %v1887
        %2091 = vmatpush.msra.mxu0 %v1886
        %2092 = vmatpush.msra.mxu0 %v1885
        %2093 = vmatpush.msra.mxu0 %v1884
        %2094 = vmatpush.msra.mxu0 %v1883
        %2095 = vmatpush.msra.mxu0 %v1882
        %2096 = vmatpush.msra.mxu0 %v1881
        %2097 = vmatpush.msra.mxu0 %v1880
        %2098 = vmatpush.msra.mxu0 %v1879
        %2099 = vmatpush.msra.mxu0 %v1878
        %2100 = vmatpush.msra.mxu0 %v1877
        %2101 = vmatpush.msra.mxu0 %v1876
        %2102 = vmatpush.msra.mxu0 %v1875
        %2103 = vmatpush.msra.mxu0 %v1874
        %2104 = vmatpush.msra.mxu0 %v1873
        %2105 = vmatmul.f32.gmra.mxu0 %v1738
        %v2106 = vpop.f32.mrf.mxu0
        %v2107 = vadd.f32 %v2084, %v2106
        %2108 = vmatmul.f32.gmra.mxu0 %v1742
        %v2109 = vpop.f32.mrf.mxu0
        %v2110 = vadd.f32 %v2087, %v2109
        %2111 = vdwg.mxu0
        %2112 = vmatpush.msra.mxu0 %v1904
        %2113 = vmatpush.msra.mxu0 %v1903
        %2114 = vmatpush.msra.mxu0 %v1902
        %2115 = vmatpush.msra.mxu0 %v1901
        %2116 = vmatpush.msra.mxu0 %v1900
        %2117 = vmatpush.msra.mxu0 %v1899
        %2118 = vmatpush.msra.mxu0 %v1898
        %2119 = vmatpush.msra.mxu0 %v1897
        %2120 = vmatpush.msra.mxu0 %v1896
        %2121 = vmatpush.msra.mxu0 %v1895
        %2122 = vmatpush.msra.mxu0 %v1894
        %2123 = vmatpush.msra.mxu0 %v1893
        %2124 = vmatpush.msra.mxu0 %v1892
        %2125 = vmatpush.msra.mxu0 %v1891
        %2126 = vmatpush.msra.mxu0 %v1890
        %2127 = vmatpush.msra.mxu0 %v1889
        %2128 = vmatmul.f32.gmra.mxu0 %v1749
        %v2129 = vpop.f32.mrf.mxu0
        %v2130 = vadd.f32 %v2107, %v2129
        %2131 = vmatmul.f32.gmra.mxu0 %v1754
        %v2132 = vpop.f32.mrf.mxu0
        %v2133 = vadd.f32 %v2110, %v2132
        %2134 = vdwg.mxu0
        %2135 = vmatpush.msra.mxu0 %v1920
        %2136 = vmatpush.msra.mxu0 %v1919
        %2137 = vmatpush.msra.mxu0 %v1918
        %2138 = vmatpush.msra.mxu0 %v1917
        %2139 = vmatpush.msra.mxu0 %v1916
        %2140 = vmatpush.msra.mxu0 %v1915
        %2141 = vmatpush.msra.mxu0 %v1914
        %2142 = vmatpush.msra.mxu0 %v1913
        %2143 = vmatpush.msra.mxu0 %v1912
        %2144 = vmatpush.msra.mxu0 %v1911
        %2145 = vmatpush.msra.mxu0 %v1910
        %2146 = vmatpush.msra.mxu0 %v1909
        %2147 = vmatpush.msra.mxu0 %v1908
        %2148 = vmatpush.msra.mxu0 %v1907
        %2149 = vmatpush.msra.mxu0 %v1906
        %2150 = vmatpush.msra.mxu0 %v1905
        %2151 = vmatmul.f32.gmra.mxu0 %v1752
        %v2152 = vpop.f32.mrf.mxu0
        %v2153 = vadd.f32 %v2130, %v2152
        %2154 = vmatmul.f32.gmra.mxu0 %v1756
        %v2155 = vpop.f32.mrf.mxu0
        %v2156 = vadd.f32 %v2133, %v2155
        %2157 = vdwg.mxu0
        %v2158 = vmax.f32 %v2153, 0.0
        %v2159 = vmax.f32 %v2156, 0.0
        %2160 = vst.msk [vmem:[%s273] sm:$0xff] %vm316, %v2158
        %2161 = vst.msk [vmem:[%s273 + $0x8] sm:$0xff] %vm316, %v2159
        %s2162 = sand.u32 %s183, 1
        %s2163 = scalar_lea.sflag [#allocation4], %s2162
        %s2164 = sand.u32 %s183, 1
        %s2165 = smul.addr %s2164, 16
        %s2166 = scalar_lea.vmem [#allocation3], %s2165
        // Predicated region
        $region49: #{super_resolution_forward.1} parent=47 // pred_check
          %p2167 = pneg %p193
        $region50: #{super_resolution_forward.1} parent=47 // pred_check_branch
          %2169 = sbr.rel (%p2167) target = $region52
        $region51: #{super_resolution_forward.1} parent=47 // pred_region
          %2171 = vsyncadd %s2163, 0
          %s2172 = smul.addr %s23, 2
          %s2173 = smul.addr %s2172, 8
          %s2174 = scalar_lea.hbm %s7, %s2173
          %s2175 = sshll.u32 %s2166, 4
          %s2176 = int_to_ptr.vmem [resolvable:$true] %s2175
          %s2177 = sshll.u32 %s2174, 4
          %s2178 = int_to_ptr.hbm [resolvable:$true] %s2177
          %2183 = dma.vmem_to_hbm [thread:$0]  %s2176, 256, %s2178, %s2163, 128, 128, 8
        $region52: #{super_resolution_forward.1} parent=47 // pred_fallthru
          _
      $region48: #{super_resolution_forward.1} parent=5 // pred_fallthru
        _
      %p2184 = scmp.le.s32.totalorder 2, %s18
      // Predicated region
      $region53: #{super_resolution_forward.1} parent=5 // pred_check
        %p2185 = pneg %p2184
      $region54: #{super_resolution_forward.1} parent=5 // pred_check_branch
        %2187 = sbr.rel (%p2185) target = $region56
      $region55: #{super_resolution_forward.1} parent=5 // pred_region
        %s2188 = ssub.s32 %s18, 2
        // Predicated region
        $region57: #{super_resolution_forward.1} parent=55 // pred_check
          %p2189 = pneg %p199
        $region58: #{super_resolution_forward.1} parent=55 // pred_check_branch
          %2191 = sbr.rel (%p2189) target = $region60
        $region59: #{super_resolution_forward.1} parent=55 // pred_region
          %s2192 = sand.u32 %s184, 1
          %s2193 = scalar_lea.sflag [#allocation4], %s2192
          %s2194 = sand.u32 %s184, 1
          %s2195 = smul.addr %s2194, 16
          %s2196 = scalar_lea.vmem [#allocation3], %s2195
          %2198 = dma.done %s2193, 256
        $region60: #{super_resolution_forward.1} parent=55 // pred_fallthru
          _
      $region56: #{super_resolution_forward.1} parent=5 // pred_fallthru
        _
    $region6: #{super_resolution_forward.1} parent=1 // loop_footer
      %s22 = sadd.s32 1, %s18
    $region7: #{super_resolution_forward.1} parent=1 // loop_footer_branch
      %17 = sbr.rel target = $region3
    $region8: #{super_resolution_forward.1} parent=1 // loop_exit
      _
    %2199 = vsyncpa [#allocation4], 1
    %s2200 = scalar_lea.sflag [#allocation4], 1
    %2201 = vsyncpa %s2200, 1

</llo_original>
